<compile_context>
chip_gen: v7x
topology: tpu7x:2x2x1
jax: 0.10.0
libtpu: 0.0.40
codegen_flags: <defaults>
</compile_context>

<pallas_src>
import functools

import jax
import jax.numpy as jnp
from jax import lax
from jax.experimental import pallas as pl
from jax.experimental.pallas import tpu as pltpu


def _flash_attention_kernel(compute_dtype, cache_kv, tile_kv,
                            gamma_ref,                 # SMEM (1,)
                            x_ref, y_ref,              # (1, C, TQ), (1, C, TK)
                            wq_ref, bq_ref,            # (Cqp, C), (Cqp, 1)
                            wk_ref, bk_ref,            # (Cqp, C), (Cqp, 1)
                            wv_ref, bv_ref,            # (C, C),   (C, 1)
                            o_ref,                     # (1, C, TQ)
                            m_ref, l_ref, acc_ref,     # (1,TQ), (1,TQ), (C,TQ)
                            q_ref,                     # (Cqp, TQ) compute dtype
                            *kv_scratch):              # optional (Cqp,HW), (C,HW)
    qi = pl.program_id(1)
    ki = pl.program_id(2)

    @pl.when(ki == 0)
    def _init():
        m_ref[...] = jnp.full(m_ref.shape, -jnp.inf, dtype=m_ref.dtype)
        l_ref[...] = jnp.zeros(l_ref.shape, dtype=l_ref.dtype)
        acc_ref[...] = jnp.zeros(acc_ref.shape, dtype=acc_ref.dtype)
        # Q projection for this q-tile: computed once, reused for every kv-tile.
        xc = x_ref[0].astype(compute_dtype)
        q = jnp.dot(wq_ref[...], xc,
                    preferred_element_type=jnp.float32) + bq_ref[...]
        q_ref[...] = q.astype(compute_dtype)

    if cache_kv:
        k_all_ref, v_all_ref = kv_scratch
        off = pl.multiple_of(ki * tile_kv, tile_kv)

        @pl.when(qi == 0)
        def _project_kv():
            # K / V projections for this kv-tile: computed only on the first q
            # sweep of each batch element, cached in VMEM for the rest.
            yc = y_ref[0].astype(compute_dtype)
            k = jnp.dot(wk_ref[...], yc,
                        preferred_element_type=jnp.float32) + bk_ref[...]
            v = jnp.dot(wv_ref[...], yc,
                        preferred_element_type=jnp.float32) + bv_ref[...]
            k_all_ref[:, pl.ds(off, tile_kv)] = k.astype(compute_dtype)
            v_all_ref[:, pl.ds(off, tile_kv)] = v.astype(compute_dtype)

        k = k_all_ref[:, pl.ds(off, tile_kv)]          # (Cqp, TK)
        v = v_all_ref[:, pl.ds(off, tile_kv)]          # (C, TK)
    else:
        yc = y_ref[0].astype(compute_dtype)
        k = (jnp.dot(wk_ref[...], yc, preferred_element_type=jnp.float32)
             + bk_ref[...]).astype(compute_dtype)
        v = (jnp.dot(wv_ref[...], yc, preferred_element_type=jnp.float32)
             + bv_ref[...]).astype(compute_dtype)

    # energy^T[j, i] = <k_j, q_i>  -> (TK, TQ): queries stay on the lane axis,
    # contraction via dot_general (no explicit .T / XLU transpose).
    energy_t = lax.dot_general(
        k, q_ref[...],
        dimension_numbers=(((0,), (0,)), ((), ())),
        preferred_element_type=jnp.float32)

    # Online softmax over the key axis (sublane axis of energy_t), all in f32.
    m_prev = m_ref[...]
    m_new = jnp.maximum(m_prev, jnp.max(energy_t, axis=0, keepdims=True))  # (1, TQ)
    alpha = jnp.exp(m_prev - m_new)                                        # (1, TQ)
    p = jnp.exp(energy_t - m_new)                                          # (TK, TQ)
    l_ref[...] = alpha * l_ref[...] + jnp.sum(p, axis=0, keepdims=True)
    acc_ref[...] = alpha * acc_ref[...] + jnp.dot(
        v, p.astype(compute_dtype), preferred_element_type=jnp.float32)    # (C, TQ)
    m_ref[...] = m_new

    @pl.when(ki == pl.num_programs(2) - 1)
    def _finalize():
        inv_l = pl.reciprocal(l_ref[...], approx=True)                     # (1, TQ)
        out = gamma_ref[0] * (acc_ref[...] * inv_l) + x_ref[0]             # f32
        o_ref[0] = out.astype(o_ref.dtype)


def _pick_tile(n, cap=512):
    for t in (cap, 384, 256, 128):
        if t <= n and n % t == 0:
            return t
    return n


def attention_pallas(x_nchw, y_nchw, params, *, use_bf16=True,
                     tile_q=None, tile_kv=None, cache_kv=None):
    """x_nchw, y_nchw: (B, C, H, W) float32.  Returns (B, C, H, W) float32."""
    B, C, H, W = x_nchw.shape
    HW = H * W
    x = x_nchw.reshape(B, C, HW).astype(jnp.float32)
    y = y_nchw.reshape(B, C, HW).astype(jnp.float32)

    wq, bq = params["wq"], params["bq"]        # (Cq, C), (Cq,)
    wk, bk = params["wk"], params["bk"]
    wv, bv = params["wv"], params["bv"]        # (C, C),  (C,)
    Cq = wq.shape[0]
    Cqp = max(8, ((Cq + 7) // 8) * 8)          # pad tiny q/k channels to sublane multiple

    compute_dtype = jnp.bfloat16 if use_bf16 else jnp.float32
    itemsize_c = jnp.dtype(compute_dtype).itemsize

    def prep_qk(w, b):
        w = jnp.pad(w, ((0, Cqp - Cq), (0, 0))).astype(compute_dtype)
        b = jnp.pad(b, ((0, Cqp - Cq),)).reshape(Cqp, 1).astype(jnp.float32)
        return w, b

    wq_p, bq_p = prep_qk(wq, bq)
    wk_p, bk_p = prep_qk(wk, bk)
    wv_p = wv.astype(compute_dtype)
    bv_p = bv.reshape(C, 1).astype(jnp.float32)
    gamma = params["gamma"].reshape(1).astype(jnp.float32)

    tq = tile_q or _pick_tile(HW)
    tk = tile_kv or _pick_tile(HW)
    assert HW % tq == 0 and HW % tk == 0, "spatial size must be divisible by tile"
    n_q, n_kv = HW // tq, HW // tk
    grid = (B, n_q, n_kv)

    def vmem_estimate(with_kv_cache):
        blocks = 2 * 4 * C * (2 * tq + tk)                       # x, out, y (f32, 2-buf)
        weights = itemsize_c * (2 * Cqp * C + C * C) + 4 * (2 * Cqp + C)
        scratch = 4 * (2 * tq + C * tq) + itemsize_c * Cqp * tq  # m, l, acc, q
        if with_kv_cache:
            scratch += itemsize_c * (Cqp + C) * HW               # K/V caches
        return blocks + weights + scratch

    if cache_kv is None:
        # Cache the full K / V projections per batch element whenever they fit VMEM.
        cache_kv = vmem_estimate(True) <= 40 * 1024 * 1024
    vmem_limit = int(min(60 * 1024 * 1024,
                         max(32 * 1024 * 1024, vmem_estimate(cache_kv) + (8 << 20))))

    q_block = lambda b, qi, ki: (b, 0, qi)
    whole = lambda b, qi, ki: (0, 0)
    if cache_kv:
        # After the first q sweep, K / V live in VMEM scratch: pin the y block
        # index for qi > 0 so Pallas does not re-DMA y from HBM on those sweeps.
        kv_block = lambda b, qi, ki: (b, 0, jnp.where(qi == 0, ki, n_kv - 1))
    else:
        kv_block = lambda b, qi, ki: (b, 0, ki)

    y_reads = 1 if cache_kv else n_q
    flops = (2 * B * HW * (2 * C * Cq + C * C)          # projections
             + 2 * B * HW * HW * (Cq + C))              # energy + attn @ v
    cost = pl.CostEstimate(
        flops=int(flops),
        transcendentals=int(B * HW * HW),
        bytes_accessed=int(4 * (2 * x.size + y.size * y_reads)
                           + B * (wq_p.size + wk_p.size + wv_p.size) * itemsize_c))

    scratch_shapes = [
        pltpu.VMEM((1, tq), jnp.float32),       # running max
        pltpu.VMEM((1, tq), jnp.float32),       # running sum
        pltpu.VMEM((C, tq), jnp.float32),       # f32 output accumulator
        pltpu.VMEM((Cqp, tq), compute_dtype),   # cached Q projection (per q-tile)
    ]
    if cache_kv:
        scratch_shapes += [
            pltpu.VMEM((Cqp, HW), compute_dtype),   # cached K projection (whole HW)
            pltpu.VMEM((C, HW), compute_dtype),     # cached V projection (whole HW)
        ]

    # With the per-batch K/V cache, qi > 0 depends on scratch written at qi == 0,
    # so only the batch axis may be split across cores.
    dim_sem = (("parallel", "arbitrary", "arbitrary") if cache_kv
               else ("parallel", "parallel", "arbitrary"))

    kernel = functools.partial(_flash_attention_kernel, compute_dtype, cache_kv, tk)

    out = pl.pallas_call(
        kernel,
        out_shape=jax.ShapeDtypeStruct((B, C, HW), jnp.float32),
        grid_spec=pltpu.PrefetchScalarGridSpec(
            num_scalar_prefetch=0,
            grid=grid,
            in_specs=[
                pl.BlockSpec(memory_space=pltpu.MemorySpace.SMEM),  # gamma
                pl.BlockSpec((1, C, tq), q_block),                  # x
                pl.BlockSpec((1, C, tk), kv_block),                 # y
                pl.BlockSpec((Cqp, C), whole),                      # wq
                pl.BlockSpec((Cqp, 1), whole),                      # bq
                pl.BlockSpec((Cqp, C), whole),                      # wk
                pl.BlockSpec((Cqp, 1), whole),                      # bk
                pl.BlockSpec((C, C), whole),                        # wv
                pl.BlockSpec((C, 1), whole),                        # bv
            ],
            out_specs=pl.BlockSpec((1, C, tq), q_block),
            scratch_shapes=scratch_shapes,
        ),
        compiler_params=pltpu.CompilerParams(
            dimension_semantics=dim_sem,
            vmem_limit_bytes=vmem_limit),
        cost_estimate=cost,
    )(gamma, x, y, wq_p, bq_p, wk_p, bk_p, wv_p, bv_p)

    return out.reshape(B, C, H, W)


def attention_reference(x_nchw, y_nchw, params):
    """Pure-JAX reference mirroring the PyTorch forward exactly."""
    B, C, H, W = x_nchw.shape
    HW = H * W
    x = x_nchw.reshape(B, C, HW)
    y = y_nchw.reshape(B, C, HW)
    q = jnp.einsum("oc,bcn->bon", params["wq"], x) + params["bq"][None, :, None]
    k = jnp.einsum("oc,bcn->bon", params["wk"], y) + params["bk"][None, :, None]
    v = jnp.einsum("oc,bcn->bon", params["wv"], y) + params["bv"][None, :, None]
    energy = jnp.einsum("bci,bcj->bij", q, k)          # energy[b, i, j] = <q_i, k_j>
    attn = jax.nn.softmax(energy, axis=-1)
    out = jnp.einsum("bij,bcj->bci", attn, v)          # (B, C, HW)
    out = params["gamma"].reshape(()) * out + x
    return out.reshape(B, C, H, W)


def init_params(key, in_dim):
    """Deterministic parameter init (same shapes as the PyTorch module, (out, in) weights)."""
    cq = in_dim // 8
    ks = jax.random.split(key, 6)
    scale = 0.1
    return {
        "wq": scale * jax.random.normal(ks[0], (cq, in_dim), jnp.float32),
        "bq": scale * jax.random.normal(ks[1], (cq,), jnp.float32),
        "wk": scale * jax.random.normal(ks[2], (cq, in_dim), jnp.float32),
        "bk": scale * jax.random.normal(ks[3], (cq,), jnp.float32),
        "wv": scale * jax.random.normal(ks[4], (in_dim, in_dim), jnp.float32),
        "bv": scale * jax.random.normal(ks[5], (in_dim,), jnp.float32),
        # PyTorch inits gamma to 0 (output == x); nonzero here so the attention
        # path is actually exercised numerically.
        "gamma": jnp.array([0.5], jnp.float32),
    }


if __name__ == "__main__":
    B, C, H, W = 2, 16, 16, 16          # in_dim=16 -> query/key channels = 2
    key = jax.random.PRNGKey(0)
    kx, ky, kp = jax.random.split(key, 3)

    x = jax.random.normal(kx, (B, C, H, W), jnp.float32)
    y = jax.random.normal(ky, (B, C, H, W), jnp.float32)
    params = init_params(kp, C)

    ref = jax.block_until_ready(attention_reference(x, y, params))

    # f32 MXU operands, explicit 128-tiles with the K/V VMEM cache
    # (exercises multi-kv online softmax + cached K/V reuse across q tiles).
    out_f32 = jax.block_until_ready(
        attention_pallas(x, y, params, use_bf16=False, tile_q=128, tile_kv=128))
    assert out_f32.shape == (B, C, H, W)
    assert jnp.allclose(out_f32, ref, atol=3e-3, rtol=3e-3), "f32 kernel mismatch vs reference"

    # bf16 MXU operands (f32 accumulation / softmax / residual), default tiling.
    out_bf16 = jax.block_until_ready(attention_pallas(x, y, params, use_bf16=True))
    assert out_bf16.shape == (B, C, H, W)
    assert jnp.allclose(out_bf16, ref, atol=3e-2, rtol=3e-2), "bf16 kernel mismatch vs reference"

    # Fallback path without the per-batch K/V VMEM cache (per-tile recompute).
    out_nocache = jax.block_until_ready(
        attention_pallas(x, y, params, use_bf16=True, tile_q=128, tile_kv=128,
                         cache_kv=False))
    assert jnp.allclose(out_nocache, ref, atol=3e-2, rtol=3e-2), "no-cache kernel mismatch"

    print("KERNEL_OK")
</pallas_src>

<mosaic_0001>
module attributes {stable_mosaic.version = 11 : i64} {
  func.func @_flash_attention_kernel(%arg0: i32, %arg1: i32, %arg2: i32, %arg3: memref<1xf32, #tpu.memory_space<smem>>, %arg4: memref<1x16x128xf32, #tpu.memory_space<vmem>>, %arg5: memref<1x16x128xf32, #tpu.memory_space<vmem>>, %arg6: memref<8x16xf32, #tpu.memory_space<vmem>>, %arg7: memref<8x1xf32, #tpu.memory_space<vmem>>, %arg8: memref<8x16xf32, #tpu.memory_space<vmem>>, %arg9: memref<8x1xf32, #tpu.memory_space<vmem>>, %arg10: memref<16x16xf32, #tpu.memory_space<vmem>>, %arg11: memref<16x1xf32, #tpu.memory_space<vmem>>, %arg12: memref<1x16x128xf32, #tpu.memory_space<vmem>>, %arg13: memref<1x128xf32, #tpu.memory_space<vmem>>, %arg14: memref<1x128xf32, #tpu.memory_space<vmem>>, %arg15: memref<16x128xf32, #tpu.memory_space<vmem>>, %arg16: memref<8x128xf32, #tpu.memory_space<vmem>>, %arg17: memref<8x256xf32, #tpu.memory_space<vmem>>, %arg18: memref<16x256xf32, #tpu.memory_space<vmem>>) attributes {dimension_semantics = [#tpu.dimension_semantics<parallel>, #tpu.dimension_semantics<arbitrary>, #tpu.dimension_semantics<arbitrary>], iteration_bounds = array<i64: 2, 2, 2>, scalar_prefetch = 0 : i64, scratch_operands = 6 : i64, tpu.core_type = #tpu.core_type<tc>, window_params = [{transform_indices = @transform_0, window_bounds = array<i64: 1>}, {transform_indices = @transform_1, window_bounds = array<i64: 1, 16, 128>}, {transform_indices = @transform_2, window_bounds = array<i64: 1, 16, 128>}, {pipeline_mode = #tpu.pipeline_mode<synchronous>, transform_indices = @transform_3, window_bounds = array<i64: 8, 16>}, {pipeline_mode = #tpu.pipeline_mode<synchronous>, transform_indices = @transform_4, window_bounds = array<i64: 8, 1>}, {pipeline_mode = #tpu.pipeline_mode<synchronous>, transform_indices = @transform_5, window_bounds = array<i64: 8, 16>}, {pipeline_mode = #tpu.pipeline_mode<synchronous>, transform_indices = @transform_6, window_bounds = array<i64: 8, 1>}, {pipeline_mode = #tpu.pipeline_mode<synchronous>, transform_indices = @transform_7, window_bounds = array<i64: 16, 16>}, {pipeline_mode = #tpu.pipeline_mode<synchronous>, transform_indices = @transform_8, window_bounds = array<i64: 16, 1>}, {transform_indices = @transform_9, window_bounds = array<i64: 1, 16, 128>}]} {
    %c0_i32 = arith.constant 0 : i32
    %0 = arith.cmpi eq, %arg2, %c0_i32 : i32
    %1 = arith.extui %0 : i1 to i32
    %c0_i32_0 = arith.constant 0 : i32
    %2 = arith.cmpi ne, %1, %c0_i32_0 : i32
    scf.if %2 {
      %cst_22 = arith.constant 0xFF800000 : f32
      %39 = vector.broadcast %cst_22 : f32 to vector<1x128xf32>
      %c0_23 = arith.constant 0 : index
      %c0_24 = arith.constant 0 : index
      %40 = vector.load %arg13[%c0_23, %c0_24] : memref<1x128xf32, #tpu.memory_space<vmem>>, vector<1x128xf32>
      tpu.vector_store %arg13[%c0_23, %c0_24], %39 {strides = array<i32>} : memref<1x128xf32, #tpu.memory_space<vmem>>, vector<1x128xf32>,
      %cst_25 = arith.constant 0.000000e+00 : f32
      %41 = vector.broadcast %cst_25 : f32 to vector<1x128xf32>
      %c0_26 = arith.constant 0 : index
      %c0_27 = arith.constant 0 : index
      %42 = vector.load %arg14[%c0_26, %c0_27] : memref<1x128xf32, #tpu.memory_space<vmem>>, vector<1x128xf32>
      tpu.vector_store %arg14[%c0_26, %c0_27], %41 {strides = array<i32>} : memref<1x128xf32, #tpu.memory_space<vmem>>, vector<1x128xf32>,
      %cst_28 = arith.constant 0.000000e+00 : f32
      %43 = vector.broadcast %cst_28 : f32 to vector<16x128xf32>
      %c0_29 = arith.constant 0 : index
      %c0_30 = arith.constant 0 : index
      %44 = vector.load %arg15[%c0_29, %c0_30] : memref<16x128xf32, #tpu.memory_space<vmem>>, vector<16x128xf32>
      tpu.vector_store %arg15[%c0_29, %c0_30], %43 {strides = array<i32>} : memref<16x128xf32, #tpu.memory_space<vmem>>, vector<16x128xf32>,
      %c0_31 = arith.constant 0 : index
      %c0_32 = arith.constant 0 : index
      %c0_33 = arith.constant 0 : index
      %45 = vector.load %arg4[%c0_31, %c0_32, %c0_33] : memref<1x16x128xf32, #tpu.memory_space<vmem>>, vector<1x16x128xf32>
      %46 = vector.shape_cast %45 : vector<1x16x128xf32> to vector<16x128xf32>
      %c0_34 = arith.constant 0 : index
      %c0_35 = arith.constant 0 : index
      %47 = vector.load %arg6[%c0_34, %c0_35] : memref<8x16xf32, #tpu.memory_space<vmem>>, vector<8x16xf32>
      %cst_36 = arith.constant dense<0.000000e+00> : vector<8x128xf32>
      %48 = tpu.matmul %47, %46, %cst_36 {dimension_numbers = #tpu.dot_dimension_numbers<[1], [0], [0], [1], [0, 0, 1, 1], [], []>} : vector<8x16xf32>, vector<16x128xf32>, vector<8x128xf32> -> vector<8x128xf32>
      %c0_37 = arith.constant 0 : index
      %c0_38 = arith.constant 0 : index
      %49 = vector.load %arg7[%c0_37, %c0_38] : memref<8x1xf32, #tpu.memory_space<vmem>>, vector<8x1xf32>
      %50 = vector.broadcast %49 : vector<8x1xf32> to vector<8x128xf32>
      %51 = arith.addf %48, %50 : vector<8x128xf32>
      %c0_39 = arith.constant 0 : index
      %c0_40 = arith.constant 0 : index
      %52 = vector.load %arg16[%c0_39, %c0_40] : memref<8x128xf32, #tpu.memory_space<vmem>>, vector<8x128xf32>
      tpu.vector_store %arg16[%c0_39, %c0_40], %51 {strides = array<i32>} : memref<8x128xf32, #tpu.memory_space<vmem>>, vector<8x128xf32>,
    } else {
    }
    %c128_i32 = arith.constant 128 : i32
    %3 = arith.muli %arg2, %c128_i32 : i32
    %4 = tpu.assume_multiple %3, 128 : i32
    %c0_i32_1 = arith.constant 0 : i32
    %5 = arith.cmpi eq, %arg1, %c0_i32_1 : i32
    %6 = arith.extui %5 : i1 to i32
    %c0_i32_2 = arith.constant 0 : i32
    %7 = arith.cmpi ne, %6, %c0_i32_2 : i32
    scf.if %7 {
      %c0_22 = arith.constant 0 : index
      %c0_23 = arith.constant 0 : index
      %c0_24 = arith.constant 0 : index
      %39 = vector.load %arg5[%c0_22, %c0_23, %c0_24] : memref<1x16x128xf32, #tpu.memory_space<vmem>>, vector<1x16x128xf32>
      %40 = vector.shape_cast %39 : vector<1x16x128xf32> to vector<16x128xf32>
      %c0_25 = arith.constant 0 : index
      %c0_26 = arith.constant 0 : index
      %41 = vector.load %arg8[%c0_25, %c0_26] : memref<8x16xf32, #tpu.memory_space<vmem>>, vector<8x16xf32>
      %cst_27 = arith.constant dense<0.000000e+00> : vector<8x128xf32>
      %42 = tpu.matmul %41, %40, %cst_27 {dimension_numbers = #tpu.dot_dimension_numbers<[1], [0], [0], [1], [0, 0, 1, 1], [], []>} : vector<8x16xf32>, vector<16x128xf32>, vector<8x128xf32> -> vector<8x128xf32>
      %c0_28 = arith.constant 0 : index
      %c0_29 = arith.constant 0 : index
      %43 = vector.load %arg9[%c0_28, %c0_29] : memref<8x1xf32, #tpu.memory_space<vmem>>, vector<8x1xf32>
      %44 = vector.broadcast %43 : vector<8x1xf32> to vector<8x128xf32>
      %45 = arith.addf %42, %44 : vector<8x128xf32>
      %c0_30 = arith.constant 0 : index
      %c0_31 = arith.constant 0 : index
      %46 = vector.load %arg10[%c0_30, %c0_31] : memref<16x16xf32, #tpu.memory_space<vmem>>, vector<16x16xf32>
      %cst_32 = arith.constant dense<0.000000e+00> : vector<16x128xf32>
      %47 = tpu.matmul %46, %40, %cst_32 {dimension_numbers = #tpu.dot_dimension_numbers<[1], [0], [0], [1], [0, 0, 1, 1], [], []>} : vector<16x16xf32>, vector<16x128xf32>, vector<16x128xf32> -> vector<16x128xf32>
      %c0_33 = arith.constant 0 : index
      %c0_34 = arith.constant 0 : index
      %48 = vector.load %arg11[%c0_33, %c0_34] : memref<16x1xf32, #tpu.memory_space<vmem>>, vector<16x1xf32>
      %49 = vector.broadcast %48 : vector<16x1xf32> to vector<16x128xf32>
      %50 = arith.addf %47, %49 : vector<16x128xf32>
      %c0_35 = arith.constant 0 : index
      %51 = arith.index_cast %4 : i32 to index
      %52 = vector.load %arg17[%c0_35, %51] : memref<8x256xf32, #tpu.memory_space<vmem>>, vector<8x128xf32>
      tpu.vector_store %arg17[%c0_35, %51], %45 {strides = array<i32>} : memref<8x256xf32, #tpu.memory_space<vmem>>, vector<8x128xf32>,
      %c0_36 = arith.constant 0 : index
      %53 = arith.index_cast %4 : i32 to index
      %54 = vector.load %arg18[%c0_36, %53] : memref<16x256xf32, #tpu.memory_space<vmem>>, vector<16x128xf32>
      tpu.vector_store %arg18[%c0_36, %53], %50 {strides = array<i32>} : memref<16x256xf32, #tpu.memory_space<vmem>>, vector<16x128xf32>,
    } else {
    }
    %c0 = arith.constant 0 : index
    %8 = arith.index_cast %4 : i32 to index
    %9 = vector.load %arg17[%c0, %8] : memref<8x256xf32, #tpu.memory_space<vmem>>, vector<8x128xf32>
    %c0_3 = arith.constant 0 : index
    %10 = arith.index_cast %4 : i32 to index
    %11 = vector.load %arg18[%c0_3, %10] : memref<16x256xf32, #tpu.memory_space<vmem>>, vector<16x128xf32>
    %c0_4 = arith.constant 0 : index
    %c0_5 = arith.constant 0 : index
    %12 = vector.load %arg16[%c0_4, %c0_5] : memref<8x128xf32, #tpu.memory_space<vmem>>, vector<8x128xf32>
    %cst = arith.constant dense<0.000000e+00> : vector<128x128xf32>
    %13 = tpu.matmul %9, %12, %cst {dimension_numbers = #tpu.dot_dimension_numbers<[0], [0], [1], [1], [0, 1, 1, 1], [], []>} : vector<8x128xf32>, vector<8x128xf32>, vector<128x128xf32> -> vector<128x128xf32>
    %c0_6 = arith.constant 0 : index
    %c0_7 = arith.constant 0 : index
    %14 = vector.load %arg13[%c0_6, %c0_7] : memref<1x128xf32, #tpu.memory_space<vmem>>, vector<1x128xf32>
    %cst_8 = arith.constant dense<0xFF800000> : vector<128xf32>
    %15 = vector.multi_reduction <maximumf>, %13, %cst_8 [0] : vector<128x128xf32> to vector<128xf32>
    %16 = vector.shape_cast %15 : vector<128xf32> to vector<1x128xf32>
    %17 = arith.maximumf %14, %16 : vector<1x128xf32>
    %18 = arith.subf %14, %17 : vector<1x128xf32>
    %19 = math.exp %18 : vector<1x128xf32>
    %20 = vector.broadcast %17 : vector<1x128xf32> to vector<128x128xf32>
    %21 = arith.subf %13, %20 : vector<128x128xf32>
    %22 = math.exp %21 : vector<128x128xf32>
    %c0_9 = arith.constant 0 : index
    %c0_10 = arith.constant 0 : index
    %23 = vector.load %arg14[%c0_9, %c0_10] : memref<1x128xf32, #tpu.memory_space<vmem>>, vector<1x128xf32>
    %24 = arith.mulf %19, %23 : vector<1x128xf32>
    %cst_11 = arith.constant dense<0.000000e+00> : vector<128xf32>
    %25 = vector.multi_reduction <add>, %22, %cst_11 [0] : vector<128x128xf32> to vector<128xf32>
    %26 = vector.shape_cast %25 : vector<128xf32> to vector<1x128xf32>
    %27 = arith.addf %24, %26 : vector<1x128xf32>
    %c0_12 = arith.constant 0 : index
    %c0_13 = arith.constant 0 : index
    %28 = vector.load %arg14[%c0_12, %c0_13] : memref<1x128xf32, #tpu.memory_space<vmem>>, vector<1x128xf32>
    tpu.vector_store %arg14[%c0_12, %c0_13], %27 {strides = array<i32>} : memref<1x128xf32, #tpu.memory_space<vmem>>, vector<1x128xf32>,
    %c0_14 = arith.constant 0 : index
    %c0_15 = arith.constant 0 : index
    %29 = vector.load %arg15[%c0_14, %c0_15] : memref<16x128xf32, #tpu.memory_space<vmem>>, vector<16x128xf32>
    %30 = vector.broadcast %19 : vector<1x128xf32> to vector<16x128xf32>
    %31 = arith.mulf %30, %29 : vector<16x128xf32>
    %cst_16 = arith.constant dense<0.000000e+00> : vector<16x128xf32>
    %32 = tpu.matmul %11, %22, %cst_16 {dimension_numbers = #tpu.dot_dimension_numbers<[1], [0], [0], [1], [0, 0, 1, 1], [], []>} : vector<16x128xf32>, vector<128x128xf32>, vector<16x128xf32> -> vector<16x128xf32>
    %33 = arith.addf %31, %32 : vector<16x128xf32>
    %c0_17 = arith.constant 0 : index
    %c0_18 = arith.constant 0 : index
    %34 = vector.load %arg15[%c0_17, %c0_18] : memref<16x128xf32, #tpu.memory_space<vmem>>, vector<16x128xf32>
    tpu.vector_store %arg15[%c0_17, %c0_18], %33 {strides = array<i32>} : memref<16x128xf32, #tpu.memory_space<vmem>>, vector<16x128xf32>,
    %c0_19 = arith.constant 0 : index
    %c0_20 = arith.constant 0 : index
    %35 = vector.load %arg13[%c0_19, %c0_20] : memref<1x128xf32, #tpu.memory_space<vmem>>, vector<1x128xf32>
    tpu.vector_store %arg13[%c0_19, %c0_20], %17 {strides = array<i32>} : memref<1x128xf32, #tpu.memory_space<vmem>>, vector<1x128xf32>,
    %c1_i32 = arith.constant 1 : i32
    %36 = arith.cmpi eq, %arg2, %c1_i32 : i32
    %37 = arith.extui %36 : i1 to i32
    %c0_i32_21 = arith.constant 0 : i32
    %38 = arith.cmpi ne, %37, %c0_i32_21 : i32
    scf.if %38 {
      %c0_22 = arith.constant 0 : index
      %c0_23 = arith.constant 0 : index
      %39 = vector.load %arg14[%c0_22, %c0_23] : memref<1x128xf32, #tpu.memory_space<vmem>>, vector<1x128xf32>
      %40 = tpu.reciprocal %39 {approx = true} : vector<1x128xf32> -> vector<1x128xf32>
      %c0_24 = arith.constant 0 : index
      %41 = memref.load %arg3[%c0_24] : memref<1xf32, #tpu.memory_space<smem>>
      %c0_25 = arith.constant 0 : index
      %c0_26 = arith.constant 0 : index
      %42 = vector.load %arg15[%c0_25, %c0_26] : memref<16x128xf32, #tpu.memory_space<vmem>>, vector<16x128xf32>
      %43 = vector.broadcast %40 : vector<1x128xf32> to vector<16x128xf32>
      %44 = arith.mulf %42, %43 : vector<16x128xf32>
      %45 = vector.broadcast %41 : f32 to vector<16x128xf32>
      %46 = arith.mulf %45, %44 : vector<16x128xf32>
      %c0_27 = arith.constant 0 : index
      %c0_28 = arith.constant 0 : index
      %c0_29 = arith.constant 0 : index
      %47 = vector.load %arg4[%c0_27, %c0_28, %c0_29] : memref<1x16x128xf32, #tpu.memory_space<vmem>>, vector<1x16x128xf32>
      %48 = vector.shape_cast %47 : vector<1x16x128xf32> to vector<16x128xf32>
      %49 = arith.addf %46, %48 : vector<16x128xf32>
      %c0_30 = arith.constant 0 : index
      %c0_31 = arith.constant 0 : index
      %c0_32 = arith.constant 0 : index
      %50 = vector.load %arg12[%c0_30, %c0_31, %c0_32] : memref<1x16x128xf32, #tpu.memory_space<vmem>>, vector<1x16x128xf32>
      %51 = vector.shape_cast %50 : vector<1x16x128xf32> to vector<16x128xf32>
      %52 = vector.shape_cast %49 : vector<16x128xf32> to vector<1x16x128xf32>
      tpu.vector_store %arg12[%c0_30, %c0_31, %c0_32], %52 {strides = array<i32>} : memref<1x16x128xf32, #tpu.memory_space<vmem>>, vector<1x16x128xf32>,
    } else {
    }
    return
  }
  func.func @transform_0(%arg0: i32, %arg1: i32, %arg2: i32) -> i32 {
    %c0_i32 = arith.constant 0 : i32
    %c0_i32_0 = arith.constant 0 : i32
    return %c0_i32 : i32
  }
  func.func @transform_1(%arg0: i32, %arg1: i32, %arg2: i32) -> (i32, i32, i32) {
    %c0_i32 = arith.constant 0 : i32
    %c0_i32_0 = arith.constant 0 : i32
    return %arg0, %c0_i32, %arg1 : i32, i32, i32
  }
  func.func @transform_2(%arg0: i32, %arg1: i32, %arg2: i32) -> (i32, i32, i32) {
    %c0_i32 = arith.constant 0 : i32
    %0 = arith.cmpi eq, %arg1, %c0_i32 : i32
    %c1_i32 = arith.constant 1 : i32
    %1 = arith.select %0, %arg2, %c1_i32 : i32
    %c0_i32_0 = arith.constant 0 : i32
    %c0_i32_1 = arith.constant 0 : i32
    return %arg0, %c0_i32_0, %1 : i32, i32, i32
  }
  func.func @transform_3(%arg0: i32, %arg1: i32, %arg2: i32) -> (i32, i32) {
    %c0_i32 = arith.constant 0 : i32
    %c0_i32_0 = arith.constant 0 : i32
    %c0_i32_1 = arith.constant 0 : i32
    return %c0_i32, %c0_i32_0 : i32, i32
  }
  func.func @transform_4(%arg0: i32, %arg1: i32, %arg2: i32) -> (i32, i32) {
    %c0_i32 = arith.constant 0 : i32
    %c0_i32_0 = arith.constant 0 : i32
    %c0_i32_1 = arith.constant 0 : i32
    return %c0_i32, %c0_i32_0 : i32, i32
  }
  func.func @transform_5(%arg0: i32, %arg1: i32, %arg2: i32) -> (i32, i32) {
    %c0_i32 = arith.constant 0 : i32
    %c0_i32_0 = arith.constant 0 : i32
    %c0_i32_1 = arith.constant 0 : i32
    return %c0_i32, %c0_i32_0 : i32, i32
  }
  func.func @transform_6(%arg0: i32, %arg1: i32, %arg2: i32) -> (i32, i32) {
    %c0_i32 = arith.constant 0 : i32
    %c0_i32_0 = arith.constant 0 : i32
    %c0_i32_1 = arith.constant 0 : i32
    return %c0_i32, %c0_i32_0 : i32, i32
  }
  func.func @transform_7(%arg0: i32, %arg1: i32, %arg2: i32) -> (i32, i32) {
    %c0_i32 = arith.constant 0 : i32
    %c0_i32_0 = arith.constant 0 : i32
    %c0_i32_1 = arith.constant 0 : i32
    return %c0_i32, %c0_i32_0 : i32, i32
  }
  func.func @transform_8(%arg0: i32, %arg1: i32, %arg2: i32) -> (i32, i32) {
    %c0_i32 = arith.constant 0 : i32
    %c0_i32_0 = arith.constant 0 : i32
    %c0_i32_1 = arith.constant 0 : i32
    return %c0_i32, %c0_i32_0 : i32, i32
  }
  func.func @transform_9(%arg0: i32, %arg1: i32, %arg2: i32) -> (i32, i32, i32) {
    %c0_i32 = arith.constant 0 : i32
    %c0_i32_0 = arith.constant 0 : i32
    return %arg0, %c0_i32, %arg1 : i32, i32, i32
  }
}

</mosaic_0001>

<llo_original>
// kernel: tpu_custom_call.1
$region0: #{tpu_custom_call.1}
  #allocation0 [shape = 'u32[]', space=smem, size = 0x4, offset = 0x4, fixed_abs, tag = 'smem constant byte address 0x4 - core index']
  #allocation1 [shape = 'u32[144,128]{1,0:T(1,128)}', space=vmem, size = 0x12000, scoped, tag = 'internal scratch']
  #allocation2 [shape = 'f32[1,128]{1,0:T(1,128)}', space=vmem, size = 0x200, scoped, tag = 'scratch operand']
  #allocation3 [shape = 'f32[1,128]{1,0:T(1,128)}', space=vmem, size = 0x200, scoped, tag = 'scratch operand']
  #allocation4 [shape = 'f32[16,128]{1,0:T(8,128)}', space=vmem, size = 0x2000, scoped, tag = 'scratch operand']
  #allocation5 [shape = 'f32[8,128]{1,0:T(8,128)}', space=vmem, size = 0x1000, scoped, tag = 'scratch operand']
  #allocation6 [shape = 'f32[8,256]{1,0:T(8,128)}', space=vmem, size = 0x2000, scoped, tag = 'scratch operand']
  #allocation7 [shape = 'f32[16,256]{1,0:T(8,128)}', space=vmem, size = 0x4000, scoped, tag = 'scratch operand']
  #allocation8 [shape = 'f32[1]{0:T(128)S(6)}', space=smem, size = 0x200, scoped, tag = 'scoped memory for tpu_custom_call.1']
  %s0 = inlined_call_operand.<no memory space> [shape: f32[1], index: 0, kind: input, shape index: {}]
  %s1 = inlined_call_operand.hbm [shape: f32[2,16,256], index: 1, kind: input, shape index: {}]
  %s2 = inlined_call_operand.hbm [shape: f32[2,16,256], index: 2, kind: input, shape index: {}]
  %s3 = inlined_call_operand.vmem [shape: f32[8,16], index: 3, kind: input, shape index: {}]
  %s4 = inlined_call_operand.vmem [shape: f32[8,1], index: 4, kind: input, shape index: {}]
  %s5 = inlined_call_operand.vmem [shape: f32[8,16], index: 5, kind: input, shape index: {}]
  %s6 = inlined_call_operand.vmem [shape: f32[8,1], index: 6, kind: input, shape index: {}]
  %s7 = inlined_call_operand.vmem [shape: f32[16,16], index: 7, kind: input, shape index: {}]
  %s8 = inlined_call_operand.vmem [shape: f32[16,1], index: 8, kind: input, shape index: {}]
  %s9 = inlined_call_operand.hbm [shape: f32[2,16,256], index: 9, kind: output, shape index: {}]
  %s10 = sld [smem:[#allocation0]]
  $region89: #{tpu_custom_call.1} parent=0
    _
  %s12 = ssub.s32 1, %s10
  %s13 = scalar_select 0, %s12, %s10
  %14 = sst [smem:[#allocation8]] %s0
  $region1: #{tpu_custom_call.1} parent=0
    #allocation9 [shape = 'u8[16384]{0}', space=vmem, size = 0x4000, scoped, tag = 'input window, operand 1']
    #allocation10 [shape = 's32[2]{0}', space=sflag, size = 0x8, scoped, tag = 'scoped memory for tpu_custom_call.1']
    #allocation11 [shape = 's32[2]{0}', space=sflag, size = 0x8, scoped, tag = 'scoped memory for tpu_custom_call.1']
    #allocation12 [shape = 'u8[16384]{0}', space=vmem, size = 0x4000, scoped, tag = 'input window, operand 2']
    #allocation13 [shape = 's32[2]{0}', space=sflag, size = 0x8, scoped, tag = 'scoped memory for tpu_custom_call.1']
    #allocation14 [shape = 'u8[16384]{0}', space=vmem, size = 0x4000, scoped, tag = 'output window, operand 0']
    %15 = vsyncpa [#allocation10], 0
    %s16 = scalar_lea.sflag [#allocation10], 1
    %17 = vsyncpa %s16, 0
    %18 = vsyncpa [#allocation13], 0
    %s19 = scalar_lea.sflag [#allocation13], 1
    %20 = vsyncpa %s19, 0
    %21 = vsyncpa [#allocation11], 0
    %s22 = scalar_lea.sflag [#allocation11], 1
    %23 = vsyncpa %s22, 0
    loop: start=0, step=1, limit=10
    $region2: #{tpu_custom_call.1} parent=1 // loop_pre_header
      _
    $region3: #{tpu_custom_call.1} parent=1 // loop_header
      %s25 = sphi 0, %s29
      %p26 = scmp.ge.s32.totalorder %s25, 10
      %s32 = sphi 0, %s51
      %s33 = sphi 0, %s47
      %s34 = sphi 0, %s43
      %s35 = sphi 0, %s32
      %s36 = sphi 0, %s33
      %s37 = sphi 0, %s34
      %s38 = sphi 0, %s35
      %s39 = sphi 0, %s36
      %s40 = sphi 0, %s37
      %s52 = sphi 0, %s52
      %s54 = sphi 0, %s52
      %s55 = sphi 0, %s54
      %s69 = sphi 0, %s55
      %s77 = sphi 0, %s79
      %s80 = sphi 0, %s77
      %s81 = sphi 0, %s80
      %s97 = sphi 0, %s81
      %s109 = sphi 0, %s111
      %s112 = sphi 0, %s109
      %s113 = sphi 0, %s112
      %s129 = sphi 0, %s113
      %s133 = sphi 0, %s133
      %s135 = sphi 0, %s133
      %s136 = sphi 0, %s135
      %s150 = sphi 0, %s136
      %s154 = sphi 0, %s154
      %s156 = sphi 0, %s154
      %s157 = sphi 0, %s156
      %s171 = sphi 0, %s157
      %s175 = sphi 0, %s175
      %s177 = sphi 0, %s175
      %s178 = sphi 0, %s177
      %s192 = sphi 0, %s178
      %s196 = sphi 0, %s196
      %s198 = sphi 0, %s196
      %s199 = sphi 0, %s198
      %s213 = sphi 0, %s199
      %s217 = sphi 0, %s217
      %s219 = sphi 0, %s217
      %s220 = sphi 0, %s219
      %s234 = sphi 0, %s220
      %s238 = sphi 0, %s238
      %s240 = sphi 0, %s238
      %s241 = sphi 0, %s240
      %s255 = sphi 0, %s241
      %s263 = sphi 0, %s265
      %s266 = sphi 0, %s263
      %s267 = sphi 0, %s266
      %s283 = sphi 0, %s267
    $region4: #{tpu_custom_call.1} parent=1 // loop_header_branch
      %28 = sbr.rel (%p26) target = $region8
    $region5: #{tpu_custom_call.1} parent=1 // loop_body
      %s30 = ssub.s32 %s25, 1
      %s31 = ssub.s32 %s25, 2
      %s41 = sadd.s32 1, %s34
      %p42 = scmp.ge.s32.totalorder %s41, 2
      %s43 = scalar_select %p42, 0, %s41
      %s44 = sadd.s32 1, %s33
      %s45 = scalar_select %p42, %s44, %s33
      %p46 = scmp.ge.s32.totalorder %s45, 2
      %s47 = scalar_select %p46, 0, %s45
      %s48 = sadd.s32 1, %s32
      %s49 = scalar_select %p46, %s48, %s32
      %p50 = scmp.ge.s32.totalorder %s49, 2
      %s51 = scalar_select %p50, 0, %s49
      %s53 = sadd.s32 %s52, 1
      %p56 = scmp.eq.s32.totalorder %s25, 7
      %p57 = scmp.ne.s32.totalorder %s52, %s54
      %p58 = scmp.eq.s32.totalorder %s25, 0
      %p59 = por %p57, %p58
      %p60 = scmp.ne.s32.totalorder %s52, %s54
      %p61 = scmp.eq.s32.totalorder %s30, 7
      %p62 = por %p60, %p61
      %p63 = scmp.ne.s32.totalorder %s54, %s55
      %p64 = scmp.eq.s32.totalorder %s30, 0
      %p65 = por %p63, %p64
      %p66 = scmp.ne.s32.totalorder %s54, %s55
      %p67 = scmp.eq.s32.totalorder %s31, 7
      %p68 = por %p66, %p67
      %p70 = scmp.ne.s32.totalorder %s55, %s69
      %p71 = scmp.eq.s32.totalorder %s31, 0
      %p72 = por %p70, %p71
      %s73 = ssub.s32 %s32, %s51
      %s74 = ssub.s32 %s33, %s47
      %s75 = sor.u32 %s73, %s74
      %p76 = scmp.eq.s32.totalorder %s75, 0
      %s78 = sadd.s32 %s77, 1
      %s79 = scalar_select %p76, %s77, %s78
      %p82 = pneg %p76
      %p83 = scmp.eq.s32.totalorder %s25, 7
      %p84 = por %p82, %p83
      %p85 = scmp.ne.s32.totalorder %s77, %s80
      %p86 = scmp.eq.s32.totalorder %s25, 0
      %p87 = por %p85, %p86
      %p88 = scmp.ne.s32.totalorder %s77, %s80
      %p89 = scmp.eq.s32.totalorder %s30, 7
      %p90 = por %p88, %p89
      %p91 = scmp.ne.s32.totalorder %s80, %s81
      %p92 = scmp.eq.s32.totalorder %s30, 0
      %p93 = por %p91, %p92
      %p94 = scmp.ne.s32.totalorder %s80, %s81
      %p95 = scmp.eq.s32.totalorder %s31, 7
      %p96 = por %p94, %p95
      %p98 = scmp.ne.s32.totalorder %s81, %s97
      %p99 = scmp.eq.s32.totalorder %s31, 0
      %p100 = por %p98, %p99
      %p101 = scmp.eq.s32.totalorder %s33, 0
      %s102 = scalar_select %p101, %s34, 1
      %p103 = scmp.eq.s32.totalorder %s47, 0
      %s104 = scalar_select %p103, %s43, 1
      %s105 = ssub.s32 %s32, %s51
      %s106 = ssub.s32 %s102, %s104
      %s107 = sor.u32 %s105, %s106
      %p108 = scmp.eq.s32.totalorder %s107, 0
      %s110 = sadd.s32 %s109, 1
      %s111 = scalar_select %p108, %s109, %s110
      %p114 = pneg %p108
      %p115 = scmp.eq.s32.totalorder %s25, 7
      %p116 = por %p114, %p115
      %p117 = scmp.ne.s32.totalorder %s109, %s112
      %p118 = scmp.eq.s32.totalorder %s25, 0
      %p119 = por %p117, %p118
      %p120 = scmp.ne.s32.totalorder %s109, %s112
      %p121 = scmp.eq.s32.totalorder %s30, 7
      %p122 = por %p120, %p121
      %p123 = scmp.ne.s32.totalorder %s112, %s113
      %p124 = scmp.eq.s32.totalorder %s30, 0
      %p125 = por %p123, %p124
      %p126 = scmp.ne.s32.totalorder %s112, %s113
      %p127 = scmp.eq.s32.totalorder %s31, 7
      %p128 = por %p126, %p127
      %p130 = scmp.ne.s32.totalorder %s113, %s129
      %p131 = scmp.eq.s32.totalorder %s31, 0
      %p132 = por %p130, %p131
      %s134 = sadd.s32 %s133, 1
      %p137 = scmp.eq.s32.totalorder %s25, 7
      %p138 = scmp.ne.s32.totalorder %s133, %s135
      %p139 = scmp.eq.s32.totalorder %s25, 0
      %p140 = por %p138, %p139
      %p141 = scmp.ne.s32.totalorder %s133, %s135
      %p142 = scmp.eq.s32.totalorder %s30, 7
      %p143 = por %p141, %p142
      %p144 = scmp.ne.s32.totalorder %s135, %s136
      %p145 = scmp.eq.s32.totalorder %s30, 0
      %p146 = por %p144, %p145
      %p147 = scmp.ne.s32.totalorder %s135, %s136
      %p148 = scmp.eq.s32.totalorder %s31, 7
      %p149 = por %p147, %p148
      %p151 = scmp.ne.s32.totalorder %s136, %s150
      %p152 = scmp.eq.s32.totalorder %s31, 0
      %p153 = por %p151, %p152
      %s155 = sadd.s32 %s154, 1
      %p158 = scmp.eq.s32.totalorder %s25, 7
      %p159 = scmp.ne.s32.totalorder %s154, %s156
      %p160 = scmp.eq.s32.totalorder %s25, 0
      %p161 = por %p159, %p160
      %p162 = scmp.ne.s32.totalorder %s154, %s156
      %p163 = scmp.eq.s32.totalorder %s30, 7
      %p164 = por %p162, %p163
      %p165 = scmp.ne.s32.totalorder %s156, %s157
      %p166 = scmp.eq.s32.totalorder %s30, 0
      %p167 = por %p165, %p166
      %p168 = scmp.ne.s32.totalorder %s156, %s157
      %p169 = scmp.eq.s32.totalorder %s31, 7
      %p170 = por %p168, %p169
      %p172 = scmp.ne.s32.totalorder %s157, %s171
      %p173 = scmp.eq.s32.totalorder %s31, 0
      %p174 = por %p172, %p173
      %s176 = sadd.s32 %s175, 1
      %p179 = scmp.eq.s32.totalorder %s25, 7
      %p180 = scmp.ne.s32.totalorder %s175, %s177
      %p181 = scmp.eq.s32.totalorder %s25, 0
      %p182 = por %p180, %p181
      %p183 = scmp.ne.s32.totalorder %s175, %s177
      %p184 = scmp.eq.s32.totalorder %s30, 7
      %p185 = por %p183, %p184
      %p186 = scmp.ne.s32.totalorder %s177, %s178
      %p187 = scmp.eq.s32.totalorder %s30, 0
      %p188 = por %p186, %p187
      %p189 = scmp.ne.s32.totalorder %s177, %s178
      %p190 = scmp.eq.s32.totalorder %s31, 7
      %p191 = por %p189, %p190
      %p193 = scmp.ne.s32.totalorder %s178, %s192
      %p194 = scmp.eq.s32.totalorder %s31, 0
      %p195 = por %p193, %p194
      %s197 = sadd.s32 %s196, 1
      %p200 = scmp.eq.s32.totalorder %s25, 7
      %p201 = scmp.ne.s32.totalorder %s196, %s198
      %p202 = scmp.eq.s32.totalorder %s25, 0
      %p203 = por %p201, %p202
      %p204 = scmp.ne.s32.totalorder %s196, %s198
      %p205 = scmp.eq.s32.totalorder %s30, 7
      %p206 = por %p204, %p205
      %p207 = scmp.ne.s32.totalorder %s198, %s199
      %p208 = scmp.eq.s32.totalorder %s30, 0
      %p209 = por %p207, %p208
      %p210 = scmp.ne.s32.totalorder %s198, %s199
      %p211 = scmp.eq.s32.totalorder %s31, 7
      %p212 = por %p210, %p211
      %p214 = scmp.ne.s32.totalorder %s199, %s213
      %p215 = scmp.eq.s32.totalorder %s31, 0
      %p216 = por %p214, %p215
      %s218 = sadd.s32 %s217, 1
      %p221 = scmp.eq.s32.totalorder %s25, 7
      %p222 = scmp.ne.s32.totalorder %s217, %s219
      %p223 = scmp.eq.s32.totalorder %s25, 0
      %p224 = por %p222, %p223
      %p225 = scmp.ne.s32.totalorder %s217, %s219
      %p226 = scmp.eq.s32.totalorder %s30, 7
      %p227 = por %p225, %p226
      %p228 = scmp.ne.s32.totalorder %s219, %s220
      %p229 = scmp.eq.s32.totalorder %s30, 0
      %p230 = por %p228, %p229
      %p231 = scmp.ne.s32.totalorder %s219, %s220
      %p232 = scmp.eq.s32.totalorder %s31, 7
      %p233 = por %p231, %p232
      %p235 = scmp.ne.s32.totalorder %s220, %s234
      %p236 = scmp.eq.s32.totalorder %s31, 0
      %p237 = por %p235, %p236
      %s239 = sadd.s32 %s238, 1
      %p242 = scmp.eq.s32.totalorder %s25, 7
      %p243 = scmp.ne.s32.totalorder %s238, %s240
      %p244 = scmp.eq.s32.totalorder %s25, 0
      %p245 = por %p243, %p244
      %p246 = scmp.ne.s32.totalorder %s238, %s240
      %p247 = scmp.eq.s32.totalorder %s30, 7
      %p248 = por %p246, %p247
      %p249 = scmp.ne.s32.totalorder %s240, %s241
      %p250 = scmp.eq.s32.totalorder %s30, 0
      %p251 = por %p249, %p250
      %p252 = scmp.ne.s32.totalorder %s240, %s241
      %p253 = scmp.eq.s32.totalorder %s31, 7
      %p254 = por %p252, %p253
      %p256 = scmp.ne.s32.totalorder %s241, %s255
      %p257 = scmp.eq.s32.totalorder %s31, 0
      %p258 = por %p256, %p257
      %s259 = ssub.s32 %s32, %s51
      %s260 = ssub.s32 %s33, %s47
      %s261 = sor.u32 %s259, %s260
      %p262 = scmp.eq.s32.totalorder %s261, 0
      %s264 = sadd.s32 %s263, 1
      %s265 = scalar_select %p262, %s263, %s264
      %p268 = pneg %p262
      %p269 = scmp.eq.s32.totalorder %s25, 7
      %p270 = por %p268, %p269
      %p271 = scmp.ne.s32.totalorder %s263, %s266
      %p272 = scmp.eq.s32.totalorder %s25, 0
      %p273 = por %p271, %p272
      %p274 = scmp.ne.s32.totalorder %s263, %s266
      %p275 = scmp.eq.s32.totalorder %s30, 7
      %p276 = por %p274, %p275
      %p277 = scmp.ne.s32.totalorder %s266, %s267
      %p278 = scmp.eq.s32.totalorder %s30, 0
      %p279 = por %p277, %p278
      %p280 = scmp.ne.s32.totalorder %s266, %s267
      %p281 = scmp.eq.s32.totalorder %s31, 7
      %p282 = por %p280, %p281
      %p284 = scmp.ne.s32.totalorder %s267, %s283
      %p285 = scmp.eq.s32.totalorder %s31, 0
      %p286 = por %p284, %p285
      %p287 = scmp.le.s32.totalorder 1, %s25
      %p288 = scmp.lt.s32.totalorder %s25, 9
      %p289 = pnand %p287, %p288
      %p290 = pneg %p289
      // Predicated region
      $region9: #{tpu_custom_call.1} parent=5 // pred_check
        _
      $region10: #{tpu_custom_call.1} parent=5 // pred_check_branch
        %292 = sbr.rel (%p289) target = $region12
      $region11: #{tpu_custom_call.1} parent=5 // pred_region
        %s293 = ssub.s32 %s25, 1
        // Predicated region
        $region13: #{tpu_custom_call.1} parent=11 // pred_check
          %p294 = pneg %p65
        $region14: #{tpu_custom_call.1} parent=11 // pred_check_branch
          %296 = sbr.rel (%p294) target = $region16
        $region15: #{tpu_custom_call.1} parent=11 // pred_region
          _
        $region16: #{tpu_custom_call.1} parent=11 // pred_fallthru
          _
        // Predicated region
        $region17: #{tpu_custom_call.1} parent=11 // pred_check
          %p297 = pneg %p146
        $region18: #{tpu_custom_call.1} parent=11 // pred_check_branch
          %299 = sbr.rel (%p297) target = $region20
        $region19: #{tpu_custom_call.1} parent=11 // pred_region
          _
        $region20: #{tpu_custom_call.1} parent=11 // pred_fallthru
          _
        // Predicated region
        $region21: #{tpu_custom_call.1} parent=11 // pred_check
          %p300 = pneg %p167
        $region22: #{tpu_custom_call.1} parent=11 // pred_check_branch
          %302 = sbr.rel (%p300) target = $region24
        $region23: #{tpu_custom_call.1} parent=11 // pred_region
          _
        $region24: #{tpu_custom_call.1} parent=11 // pred_fallthru
          _
        // Predicated region
        $region25: #{tpu_custom_call.1} parent=11 // pred_check
          %p303 = pneg %p188
        $region26: #{tpu_custom_call.1} parent=11 // pred_check_branch
          %305 = sbr.rel (%p303) target = $region28
        $region27: #{tpu_custom_call.1} parent=11 // pred_region
          _
        $region28: #{tpu_custom_call.1} parent=11 // pred_fallthru
          _
        // Predicated region
        $region29: #{tpu_custom_call.1} parent=11 // pred_check
          %p306 = pneg %p209
        $region30: #{tpu_custom_call.1} parent=11 // pred_check_branch
          %308 = sbr.rel (%p306) target = $region32
        $region31: #{tpu_custom_call.1} parent=11 // pred_region
          _
        $region32: #{tpu_custom_call.1} parent=11 // pred_fallthru
          _
        // Predicated region
        $region33: #{tpu_custom_call.1} parent=11 // pred_check
          %p309 = pneg %p230
        $region34: #{tpu_custom_call.1} parent=11 // pred_check_branch
          %311 = sbr.rel (%p309) target = $region36
        $region35: #{tpu_custom_call.1} parent=11 // pred_region
          _
        $region36: #{tpu_custom_call.1} parent=11 // pred_fallthru
          _
        // Predicated region
        $region37: #{tpu_custom_call.1} parent=11 // pred_check
          %p312 = pneg %p251
        $region38: #{tpu_custom_call.1} parent=11 // pred_check_branch
          %314 = sbr.rel (%p312) target = $region40
        $region39: #{tpu_custom_call.1} parent=11 // pred_region
          _
        $region40: #{tpu_custom_call.1} parent=11 // pred_fallthru
          _
      $region12: #{tpu_custom_call.1} parent=5 // pred_fallthru
        _
      %p315 = scmp.lt.s32.totalorder %s25, 8
      // Predicated region
      $region41: #{tpu_custom_call.1} parent=5 // pred_check
        %p316 = pneg %p315
      $region42: #{tpu_custom_call.1} parent=5 // pred_check_branch
        %318 = sbr.rel (%p316) target = $region44
      $region43: #{tpu_custom_call.1} parent=5 // pred_region
        // Predicated region
        $region45: #{tpu_custom_call.1} parent=43 // pred_check
          %p319 = pneg %p87
        $region46: #{tpu_custom_call.1} parent=43 // pred_check_branch
          %321 = sbr.rel (%p319) target = $region48
        $region47: #{tpu_custom_call.1} parent=43 // pred_region
          %s322 = sand.u32 %s77, 1
          %s323 = scalar_lea.sflag [#allocation10], %s322
          %s324 = sand.u32 %s77, 1
          %s325 = smul.addr %s324, 16
          %s326 = scalar_lea.vmem [#allocation9], %s325
          %s328 = ssub.s32 256, 256
          %329 = vsyncadd %s323, %s328
          %s330 = smul.addr %s32, 4
          %s331 = sadd.s32 %s33, %s330
          %s332 = smul.addr %s331, 128
          %s333 = scalar_lea.hbm %s1, %s332
          %s334 = sshll.u32 %s326, 4
          %s335 = int_to_ptr.vmem [resolvable:$true] %s334
          %340 = dma.hbm_to_vmem [thread:$0]  %s333, 256, %s335, %s323, 256, 128, 8
        $region48: #{tpu_custom_call.1} parent=43 // pred_fallthru
          _
        // Predicated region
        $region49: #{tpu_custom_call.1} parent=43 // pred_check
          %p341 = pneg %p119
        $region50: #{tpu_custom_call.1} parent=43 // pred_check_branch
          %343 = sbr.rel (%p341) target = $region52
        $region51: #{tpu_custom_call.1} parent=43 // pred_region
          %s344 = sand.u32 %s109, 1
          %s345 = scalar_lea.sflag [#allocation13], %s344
          %s346 = sand.u32 %s109, 1
          %s347 = smul.addr %s346, 16
          %s348 = scalar_lea.vmem [#allocation12], %s347
          %p349 = scmp.eq.s32.totalorder %s33, 0
          %s350 = scalar_select %p349, %s34, 1
          %s352 = ssub.s32 256, 256
          %353 = vsyncadd %s345, %s352
          %s354 = smul.addr %s32, 4
          %s355 = sadd.s32 %s350, %s354
          %s356 = smul.addr %s355, 128
          %s357 = scalar_lea.hbm %s2, %s356
          %s358 = sshll.u32 %s348, 4
          %s359 = int_to_ptr.vmem [resolvable:$true] %s358
          %364 = dma.hbm_to_vmem [thread:$0]  %s357, 256, %s359, %s345, 256, 128, 8
        $region52: #{tpu_custom_call.1} parent=43 // pred_fallthru
          _
      $region44: #{tpu_custom_call.1} parent=5 // pred_fallthru
        _
      %p365 = scmp.le.s32.totalorder 1, %s25
      %p366 = scmp.lt.s32.totalorder %s25, 9
      %p367 = pnand %p365, %p366
      %p368 = pneg %p367
      // Predicated region
      $region53: #{tpu_custom_call.1} parent=5 // pred_check
        _
      $region54: #{tpu_custom_call.1} parent=5 // pred_check_branch
        %370 = sbr.rel (%p367) target = $region56
      $region55: #{tpu_custom_call.1} parent=5 // pred_region
        %s371 = ssub.s32 %s25, 1
        %s372 = sand.u32 %s80, 1
        %s373 = scalar_lea.sflag [#allocation10], %s372
        %s374 = sand.u32 %s80, 1
        %s375 = smul.addr %s374, 16
        %s376 = scalar_lea.vmem [#allocation9], %s375
        // Predicated region
        $region57: #{tpu_custom_call.1} parent=55 // pred_check
          %p377 = pneg %p93
        $region58: #{tpu_custom_call.1} parent=55 // pred_check_branch
          %379 = sbr.rel (%p377) target = $region60
        $region59: #{tpu_custom_call.1} parent=55 // pred_region
          %380 = dma.done %s373, 256
        $region60: #{tpu_custom_call.1} parent=55 // pred_fallthru
          _
        %s381 = sand.u32 %s112, 1
        %s382 = scalar_lea.sflag [#allocation13], %s381
        %s383 = sand.u32 %s112, 1
        %s384 = smul.addr %s383, 16
        %s385 = scalar_lea.vmem [#allocation12], %s384
        // Predicated region
        $region61: #{tpu_custom_call.1} parent=55 // pred_check
          %p386 = pneg %p125
        $region62: #{tpu_custom_call.1} parent=55 // pred_check_branch
          %388 = sbr.rel (%p386) target = $region64
        $region63: #{tpu_custom_call.1} parent=55 // pred_region
          %389 = dma.done %s382, 256
        $region64: #{tpu_custom_call.1} parent=55 // pred_fallthru
          _
        %p390 = pneg %p65
        %p391 = pneg %p62
        %s392 = sand.u32 %s80, 1
        %s393 = scalar_lea.sflag [#allocation10], %s392
        %s394 = sand.u32 %s80, 1
        %s395 = smul.addr %s394, 16
        %s396 = scalar_lea.vmem [#allocation9], %s395
        %p397 = pneg %p93
        %p398 = pneg %p90
        %s399 = sand.u32 %s112, 1
        %s400 = scalar_lea.sflag [#allocation13], %s399
        %s401 = sand.u32 %s112, 1
        %s402 = smul.addr %s401, 16
        %s403 = scalar_lea.vmem [#allocation12], %s402
        %p404 = pneg %p125
        %p405 = pneg %p122
        %p406 = pneg %p146
        %p407 = pneg %p143
        %p408 = pneg %p167
        %p409 = pneg %p164
        %p410 = pneg %p188
        %p411 = pneg %p185
        %p412 = pneg %p209
        %p413 = pneg %p206
        %p414 = pneg %p230
        %p415 = pneg %p227
        %p416 = pneg %p251
        %p417 = pneg %p248
        %p418 = pneg %p279
        %p419 = pneg %p276
        %s420 = sand.u32 %s266, 1
        %s421 = scalar_lea.sflag [#allocation11], %s420
        %s422 = sand.u32 %s266, 1
        %s423 = smul.addr %s422, 16
        %s424 = scalar_lea.vmem [#allocation14], %s423
        %p425 = scmp.eq.s32.totalorder %s36, 0
        %s426 = scalar_select %p425, %s37, 1
        %p427 = scmp.eq.s32.totalorder %s37, 0
        // Predicated region
        $region65: #{tpu_custom_call.1} parent=55 // pred_check
          %p428 = pneg %p427
        $region66: #{tpu_custom_call.1} parent=55 // pred_check_branch
          %430 = sbr.rel (%p428) target = $region68
        $region67: #{tpu_custom_call.1} parent=55 // pred_region
          %431 = vst [vmem:[#allocation2] sm:$0x1] -inf
          %432 = vst [vmem:[#allocation3] sm:$0x1] 0.0
          %433 = vst [vmem:[#allocation4] sm:$0xff] 0.0
          %434 = vst [vmem:[#allocation4 + $0x8] sm:$0xff] 0.0
          %v435 = vld [vmem:[%s376] sm:$0xff]
          %v436 = vld [vmem:[%s376 + $0x8] sm:$0xff]
          %v437 = vld [vmem:[%s3] sm:$0xff]
          %v438 = vld [vmem:[%s4] sm:$0xff]
          %440 = vset.pattern.permute.xlu0 0
          %441 = vperm.xlu0 %440, %v438
          %v442 = vpop.permute.xlu0 %441
          %vm444 = vcmask 130048
          %v446 = vsel %vm444, %v437, 0
          %448 = vmatprep.subr.mxu0 0.0
          %449 = vmatpush1.msra.mxu0 %v435
          %450 = vmatprep.subr.mxu0 0.0
          %451 = vmatpush1.msra.mxu0 %v436
          %452 = vmatprep.subr.mxu0 0.0
          %453 = vmatpush1.msra.mxu0 0.0
          %454 = vmatprep.subr.mxu0 0.0
          %455 = vmatpush1.msra.mxu0 0.0
          %456 = vmatprep.subr.mxu0 0.0
          %457 = vmatpush1.msra.mxu0 0.0
          %458 = vmatprep.subr.mxu0 0.0
          %459 = vmatpush1.msra.mxu0 0.0
          %460 = vmatprep.subr.mxu0 0.0
          %461 = vmatpush1.msra.mxu0 0.0
          %462 = vmatprep.subr.mxu0 0.0
          %463 = vmatpush1.msra.mxu0 0.0
          %464 = vmatprep.subr.mxu0 0.0
          %465 = vmatpush1.msra.mxu0 0.0
          %466 = vmatprep.subr.mxu0 0.0
          %467 = vmatpush1.msra.mxu0 0.0
          %468 = vmatprep.subr.mxu0 0.0
          %469 = vmatpush1.msra.mxu0 0.0
          %470 = vmatprep.subr.mxu0 0.0
          %471 = vmatpush1.msra.mxu0 0.0
          %472 = vmatprep.subr.mxu0 0.0
          %473 = vmatpush1.msra.mxu0 0.0
          %474 = vmatprep.subr.mxu0 0.0
          %475 = vmatpush1.msra.mxu0 0.0
          %476 = vmatprep.subr.mxu0 0.0
          %477 = vmatpush1.msra.mxu0 0.0
          %478 = vmatprep.subr.mxu0 0.0
          %479 = vmatpush1.msra.mxu0 0.0
          %480 = vmatprep.subr.mxu0 0.0
          %481 = vmatpush1.msra.mxu0 0.0
          %482 = vmatprep.subr.mxu0 0.0
          %483 = vmatpush1.msra.mxu0 0.0
          %484 = vmatprep.subr.mxu0 0.0
          %485 = vmatpush1.msra.mxu0 0.0
          %486 = vmatprep.subr.mxu0 0.0
          %487 = vmatpush1.msra.mxu0 0.0
          %488 = vmatprep.subr.mxu0 0.0
          %489 = vmatpush1.msra.mxu0 0.0
          %490 = vmatprep.subr.mxu0 0.0
          %491 = vmatpush1.msra.mxu0 0.0
          %492 = vmatprep.subr.mxu0 0.0
          %493 = vmatpush1.msra.mxu0 0.0
          %494 = vmatprep.subr.mxu0 0.0
          %495 = vmatpush1.msra.mxu0 0.0
          %496 = vmatprep.subr.mxu0 0.0
          %497 = vmatpush1.msra.mxu0 0.0
          %498 = vmatprep.subr.mxu0 0.0
          %499 = vmatpush1.msra.mxu0 0.0
          %500 = vmatprep.subr.mxu0 0.0
          %501 = vmatpush1.msra.mxu0 0.0
          %502 = vmatprep.subr.mxu0 0.0
          %503 = vmatpush1.msra.mxu0 0.0
          %504 = vmatprep.subr.mxu0 0.0
          %505 = vmatpush1.msra.mxu0 0.0
          %506 = vmatprep.subr.mxu0 0.0
          %507 = vmatpush1.msra.mxu0 0.0
          %508 = vmatprep.subr.mxu0 0.0
          %509 = vmatpush1.msra.mxu0 0.0
          %510 = vmatprep.subr.mxu0 0.0
          %511 = vmatpush1.msra.mxu0 0.0
          %512 = vmatprep.mubr.f32.mxu0 0.0
          %513 = vmatmul.mubr.f32.gmra.mrb[0].mxu0 %v446
          %v514 = vpop.f32.mrb[0].mxu0
          %v515 = vadd.f32 %v442, %v514
          %v516 = vpop.f32.mrb[0].mxu0
          %517 = vdwg.mxu0
          %518 = vst [vmem:[#allocation5] sm:$0xff] %v515
        $region68: #{tpu_custom_call.1} parent=55 // pred_fallthru
          _
        %s519 = smul.u32 %s37, 128
        %p520 = scmp.eq.s32.totalorder %s36, 0
        // Predicated region
        $region69: #{tpu_custom_call.1} parent=55 // pred_check
          %p521 = pneg %p520
        $region70: #{tpu_custom_call.1} parent=55 // pred_check_branch
          %523 = sbr.rel (%p521) target = $region72
        $region71: #{tpu_custom_call.1} parent=55 // pred_region
          %v524 = vld [vmem:[%s385] sm:$0xff]
          %v525 = vld [vmem:[%s385 + $0x8] sm:$0xff]
          %v526 = vld [vmem:[%s5] sm:$0xff]
          %v527 = vld [vmem:[%s6] sm:$0xff]
          %529 = vset.pattern.permute.xlu0 0
          %530 = vperm.xlu0 %529, %v527
          %v531 = vpop.permute.xlu0 %530
          %vm533 = vcmask 130048
          %v535 = vsel %vm533, %v526, 0
          %537 = vmatprep.subr.mxu0 0.0
          %538 = vmatpush1.msra.mxu0 %v524
          %539 = vmatprep.subr.mxu0 0.0
          %540 = vmatpush1.msra.mxu0 %v525
          %541 = vmatprep.subr.mxu0 0.0
          %542 = vmatpush1.msra.mxu0 0.0
          %543 = vmatprep.subr.mxu0 0.0
          %544 = vmatpush1.msra.mxu0 0.0
          %545 = vmatprep.subr.mxu0 0.0
          %546 = vmatpush1.msra.mxu0 0.0
          %547 = vmatprep.subr.mxu0 0.0
          %548 = vmatpush1.msra.mxu0 0.0
          %549 = vmatprep.subr.mxu0 0.0
          %550 = vmatpush1.msra.mxu0 0.0
          %551 = vmatprep.subr.mxu0 0.0
          %552 = vmatpush1.msra.mxu0 0.0
          %553 = vmatprep.subr.mxu0 0.0
          %554 = vmatpush1.msra.mxu0 0.0
          %555 = vmatprep.subr.mxu0 0.0
          %556 = vmatpush1.msra.mxu0 0.0
          %557 = vmatprep.subr.mxu0 0.0
          %558 = vmatpush1.msra.mxu0 0.0
          %559 = vmatprep.subr.mxu0 0.0
          %560 = vmatpush1.msra.mxu0 0.0
          %561 = vmatprep.subr.mxu0 0.0
          %562 = vmatpush1.msra.mxu0 0.0
          %563 = vmatprep.subr.mxu0 0.0
          %564 = vmatpush1.msra.mxu0 0.0
          %565 = vmatprep.subr.mxu0 0.0
          %566 = vmatpush1.msra.mxu0 0.0
          %567 = vmatprep.subr.mxu0 0.0
          %568 = vmatpush1.msra.mxu0 0.0
          %569 = vmatprep.subr.mxu0 0.0
          %570 = vmatpush1.msra.mxu0 0.0
          %571 = vmatprep.subr.mxu0 0.0
          %572 = vmatpush1.msra.mxu0 0.0
          %573 = vmatprep.subr.mxu0 0.0
          %574 = vmatpush1.msra.mxu0 0.0
          %575 = vmatprep.subr.mxu0 0.0
          %576 = vmatpush1.msra.mxu0 0.0
          %577 = vmatprep.subr.mxu0 0.0
          %578 = vmatpush1.msra.mxu0 0.0
          %579 = vmatprep.subr.mxu0 0.0
          %580 = vmatpush1.msra.mxu0 0.0
          %581 = vmatprep.subr.mxu0 0.0
          %582 = vmatpush1.msra.mxu0 0.0
          %583 = vmatprep.subr.mxu0 0.0
          %584 = vmatpush1.msra.mxu0 0.0
          %585 = vmatprep.subr.mxu0 0.0
          %586 = vmatpush1.msra.mxu0 0.0
          %587 = vmatprep.subr.mxu0 0.0
          %588 = vmatpush1.msra.mxu0 0.0
          %589 = vmatprep.subr.mxu0 0.0
          %590 = vmatpush1.msra.mxu0 0.0
          %591 = vmatprep.subr.mxu0 0.0
          %592 = vmatpush1.msra.mxu0 0.0
          %593 = vmatprep.subr.mxu0 0.0
          %594 = vmatpush1.msra.mxu0 0.0
          %595 = vmatprep.subr.mxu0 0.0
          %596 = vmatpush1.msra.mxu0 0.0
          %597 = vmatprep.subr.mxu0 0.0
          %598 = vmatpush1.msra.mxu0 0.0
          %599 = vmatprep.subr.mxu0 0.0
          %600 = vmatpush1.msra.mxu0 0.0
          %601 = vmatprep.mubr.f32.mxu0 0.0
          %602 = vmatmul.mubr.f32.gmra.mrb[0].mxu0 %v535
          %v603 = vpop.f32.mrb[0].mxu0
          %v604 = vadd.f32 %v531, %v603
          %v605 = vpop.f32.mrb[0].mxu0
          %606 = vdwg.mxu0
          %v607 = vld [vmem:[%s7] sm:$0xff]
          %v608 = vld [vmem:[%s7 + $0x8] sm:$0xff]
          %v609 = vld [vmem:[%s8] sm:$0xff]
          %v610 = vld [vmem:[%s8 + $0x8] sm:$0xff]
          %612 = vset.pattern.permute.xlu0 0
          %613 = vperm.xlu0 %612, %v609
          %v614 = vpop.permute.xlu0 %613
          %617 = vset.pattern.permute.xlu0 0
          %618 = vperm.xlu0 %617, %v610
          %v619 = vpop.permute.xlu0 %618
          %v622 = vsel %vm533, %v607, 0
          %v625 = vsel %vm533, %v608, 0
          %627 = vmatprep.subr.mxu0 0.0
          %628 = vmatpush1.msra.mxu0 %v524
          %629 = vmatprep.subr.mxu0 0.0
          %630 = vmatpush1.msra.mxu0 %v525
          %631 = vmatprep.subr.mxu0 0.0
          %632 = vmatpush1.msra.mxu0 0.0
          %633 = vmatprep.subr.mxu0 0.0
          %634 = vmatpush1.msra.mxu0 0.0
          %635 = vmatprep.subr.mxu0 0.0
          %636 = vmatpush1.msra.mxu0 0.0
          %637 = vmatprep.subr.mxu0 0.0
          %638 = vmatpush1.msra.mxu0 0.0
          %639 = vmatprep.subr.mxu0 0.0
          %640 = vmatpush1.msra.mxu0 0.0
          %641 = vmatprep.subr.mxu0 0.0
          %642 = vmatpush1.msra.mxu0 0.0
          %643 = vmatprep.subr.mxu0 0.0
          %644 = vmatpush1.msra.mxu0 0.0
          %645 = vmatprep.subr.mxu0 0.0
          %646 = vmatpush1.msra.mxu0 0.0
          %647 = vmatprep.subr.mxu0 0.0
          %648 = vmatpush1.msra.mxu0 0.0
          %649 = vmatprep.subr.mxu0 0.0
          %650 = vmatpush1.msra.mxu0 0.0
          %651 = vmatprep.subr.mxu0 0.0
          %652 = vmatpush1.msra.mxu0 0.0
          %653 = vmatprep.subr.mxu0 0.0
          %654 = vmatpush1.msra.mxu0 0.0
          %655 = vmatprep.subr.mxu0 0.0
          %656 = vmatpush1.msra.mxu0 0.0
          %657 = vmatprep.subr.mxu0 0.0
          %658 = vmatpush1.msra.mxu0 0.0
          %659 = vmatprep.subr.mxu0 0.0
          %660 = vmatpush1.msra.mxu0 0.0
          %661 = vmatprep.subr.mxu0 0.0
          %662 = vmatpush1.msra.mxu0 0.0
          %663 = vmatprep.subr.mxu0 0.0
          %664 = vmatpush1.msra.mxu0 0.0
          %665 = vmatprep.subr.mxu0 0.0
          %666 = vmatpush1.msra.mxu0 0.0
          %667 = vmatprep.subr.mxu0 0.0
          %668 = vmatpush1.msra.mxu0 0.0
          %669 = vmatprep.subr.mxu0 0.0
          %670 = vmatpush1.msra.mxu0 0.0
          %671 = vmatprep.subr.mxu0 0.0
          %672 = vmatpush1.msra.mxu0 0.0
          %673 = vmatprep.subr.mxu0 0.0
          %674 = vmatpush1.msra.mxu0 0.0
          %675 = vmatprep.subr.mxu0 0.0
          %676 = vmatpush1.msra.mxu0 0.0
          %677 = vmatprep.subr.mxu0 0.0
          %678 = vmatpush1.msra.mxu0 0.0
          %679 = vmatprep.subr.mxu0 0.0
          %680 = vmatpush1.msra.mxu0 0.0
          %681 = vmatprep.subr.mxu0 0.0
          %682 = vmatpush1.msra.mxu0 0.0
          %683 = vmatprep.subr.mxu0 0.0
          %684 = vmatpush1.msra.mxu0 0.0
          %685 = vmatprep.subr.mxu0 0.0
          %686 = vmatpush1.msra.mxu0 0.0
          %687 = vmatprep.subr.mxu0 0.0
          %688 = vmatpush1.msra.mxu0 0.0
          %689 = vmatprep.subr.mxu0 0.0
          %690 = vmatpush1.msra.mxu0 0.0
          %691 = vmatprep.mubr.f32.mxu0 0.0
          %692 = vmatmul.mubr.f32.gmra.mrb[0].mxu0 %v622
          %v693 = vpop.f32.mrb[0].mxu0
          %v694 = vadd.f32 %v614, %v693
          %v695 = vpop.f32.mrb[0].mxu0
          %696 = vmatprep.mubr.f32.mxu0 0.0
          %697 = vmatmul.mubr.f32.gmra.mrb[0].mxu0 %v625
          %v698 = vpop.f32.mrb[0].mxu0
          %v699 = vadd.f32 %v619, %v698
          %v700 = vpop.f32.mrb[0].mxu0
          %701 = vdwg.mxu0
          %s702 = sshra.s32 %s519, 7
          %s703 = sand.u32 %s519, 127
          %s704 = smul.addr %s702, 8
          %s705 = scalar_lea.vmem [#allocation6], %s704
          %706 = vst [vmem:[%s705] sm:$0xff] %v604
          %s707 = smul.addr %s702, 8
          %s708 = scalar_lea.vmem [#allocation7], %s707
          %709 = vst [vmem:[%s708] sm:$0xff] %v694
          %710 = vst [vmem:[%s708 + $0x10] sm:$0xff] %v699
        $region72: #{tpu_custom_call.1} parent=55 // pred_fallthru
          _
        %s711 = sshra.s32 %s519, 7
        %s712 = sand.u32 %s519, 127
        %s713 = smul.addr %s711, 8
        %s714 = scalar_lea.vmem [#allocation6], %s713
        %v715 = vld [vmem:[%s714] sm:$0xff]
        %s716 = smul.addr %s711, 8
        %s717 = scalar_lea.vmem [#allocation7], %s716
        %v718 = vld [vmem:[%s717] sm:$0xff]
        %v719 = vld [vmem:[%s717 + $0x10] sm:$0xff]
        %v720 = vld [vmem:[#allocation5] sm:$0xff]
        %721 = vxpose.xlu0.b32.start [1/16] %v715, 128
        %722 = vxpose.xlu0.b32.cont [2/16] 0.0, 128
        %723 = vxpose.xlu0.b32.cont [3/16] 0.0, 128
        %724 = vxpose.xlu0.b32.cont [4/16] 0.0, 128
        %725 = vxpose.xlu0.b32.cont [5/16] 0.0, 128
        %726 = vxpose.xlu0.b32.cont [6/16] 0.0, 128
        %727 = vxpose.xlu0.b32.cont [7/16] 0.0, 128
        %728 = vxpose.xlu0.b32.cont [8/16] 0.0, 128
        %729 = vxpose.xlu0.b32.cont [9/16] 0.0, 128
        %730 = vxpose.xlu0.b32.cont [10/16] 0.0, 128
        %731 = vxpose.xlu0.b32.cont [11/16] 0.0, 128
        %732 = vxpose.xlu0.b32.cont [12/16] 0.0, 128
        %733 = vxpose.xlu0.b32.cont [13/16] 0.0, 128
        %734 = vxpose.xlu0.b32.cont [14/16] 0.0, 128
        %735 = vxpose.xlu0.b32.cont [15/16] 0.0, 128
        %736 = vxpose.xlu0.b32.end [16/16] 0.0, 128
        %v737 = vpop.trf.xlu0
        %v738 = vpop.trf.xlu0
        %v739 = vpop.trf.xlu0
        %v740 = vpop.trf.xlu0
        %v741 = vpop.trf.xlu0
        %v742 = vpop.trf.xlu0
        %v743 = vpop.trf.xlu0
        %v744 = vpop.trf.xlu0
        %v745 = vpop.trf.xlu0
        %v746 = vpop.trf.xlu0
        %v747 = vpop.trf.xlu0
        %v748 = vpop.trf.xlu0
        %v749 = vpop.trf.xlu0
        %v750 = vpop.trf.xlu0
        %v751 = vpop.trf.xlu0
        %v752 = vpop.trf.xlu0
        %vm753 = vcmask 64512
        %v755 = vsel %vm753, %v737, 0
        %v758 = vsel %vm753, %v738, 0
        %v761 = vsel %vm753, %v739, 0
        %v764 = vsel %vm753, %v740, 0
        %v767 = vsel %vm753, %v741, 0
        %v770 = vsel %vm753, %v742, 0
        %v773 = vsel %vm753, %v743, 0
        %v776 = vsel %vm753, %v744, 0
        %v779 = vsel %vm753, %v745, 0
        %v782 = vsel %vm753, %v746, 0
        %v785 = vsel %vm753, %v747, 0
        %v788 = vsel %vm753, %v748, 0
        %v791 = vsel %vm753, %v749, 0
        %v794 = vsel %vm753, %v750, 0
        %v797 = vsel %vm753, %v751, 0
        %v800 = vsel %vm753, %v752, 0
        %802 = vmatprep.subr.mxu0 0.0
        %803 = vmatpush1.msra.mxu0 %v720
        %804 = vmatprep.subr.mxu0 0.0
        %805 = vmatpush1.msra.mxu0 0.0
        %806 = vmatprep.subr.mxu0 0.0
        %807 = vmatpush1.msra.mxu0 0.0
        %808 = vmatprep.subr.mxu0 0.0
        %809 = vmatpush1.msra.mxu0 0.0
        %810 = vmatprep.subr.mxu0 0.0
        %811 = vmatpush1.msra.mxu0 0.0
        %812 = vmatprep.subr.mxu0 0.0
        %813 = vmatpush1.msra.mxu0 0.0
        %814 = vmatprep.subr.mxu0 0.0
        %815 = vmatpush1.msra.mxu0 0.0
        %816 = vmatprep.subr.mxu0 0.0
        %817 = vmatpush1.msra.mxu0 0.0
        %818 = vmatprep.subr.mxu0 0.0
        %819 = vmatpush1.msra.mxu0 0.0
        %820 = vmatprep.subr.mxu0 0.0
        %821 = vmatpush1.msra.mxu0 0.0
        %822 = vmatprep.subr.mxu0 0.0
        %823 = vmatpush1.msra.mxu0 0.0
        %824 = vmatprep.subr.mxu0 0.0
        %825 = vmatpush1.msra.mxu0 0.0
        %826 = vmatprep.subr.mxu0 0.0
        %827 = vmatpush1.msra.mxu0 0.0
        %828 = vmatprep.subr.mxu0 0.0
        %829 = vmatpush1.msra.mxu0 0.0
        %830 = vmatprep.subr.mxu0 0.0
        %831 = vmatpush1.msra.mxu0 0.0
        %832 = vmatprep.subr.mxu0 0.0
        %833 = vmatpush1.msra.mxu0 0.0
        %834 = vmatprep.subr.mxu0 0.0
        %835 = vmatpush1.msra.mxu0 0.0
        %836 = vmatprep.subr.mxu0 0.0
        %837 = vmatpush1.msra.mxu0 0.0
        %838 = vmatprep.subr.mxu0 0.0
        %839 = vmatpush1.msra.mxu0 0.0
        %840 = vmatprep.subr.mxu0 0.0
        %841 = vmatpush1.msra.mxu0 0.0
        %842 = vmatprep.subr.mxu0 0.0
        %843 = vmatpush1.msra.mxu0 0.0
        %844 = vmatprep.subr.mxu0 0.0
        %845 = vmatpush1.msra.mxu0 0.0
        %846 = vmatprep.subr.mxu0 0.0
        %847 = vmatpush1.msra.mxu0 0.0
        %848 = vmatprep.subr.mxu0 0.0
        %849 = vmatpush1.msra.mxu0 0.0
        %850 = vmatprep.subr.mxu0 0.0
        %851 = vmatpush1.msra.mxu0 0.0
        %852 = vmatprep.subr.mxu0 0.0
        %853 = vmatpush1.msra.mxu0 0.0
        %854 = vmatprep.subr.mxu0 0.0
        %855 = vmatpush1.msra.mxu0 0.0
        %856 = vmatprep.subr.mxu0 0.0
        %857 = vmatpush1.msra.mxu0 0.0
        %858 = vmatprep.subr.mxu0 0.0
        %859 = vmatpush1.msra.mxu0 0.0
        %860 = vmatprep.subr.mxu0 0.0
        %861 = vmatpush1.msra.mxu0 0.0
        %862 = vmatprep.subr.mxu0 0.0
        %863 = vmatpush1.msra.mxu0 0.0
        %864 = vmatprep.subr.mxu0 0.0
        %865 = vmatpush1.msra.mxu0 0.0
        %866 = vmatprep.mubr.f32.mxu0 0.0
        %867 = vmatmul.mubr.f32.gmra.mrb[0].mxu0 %v755
        %v868 = vpop.f32.mrb[0].mxu0
        %v869 = vadd.f32 0.0, %v868
        %v870 = vpop.f32.mrb[0].mxu0
        %871 = vmatprep.mubr.f32.mxu0 0.0
        %872 = vmatmul.mubr.f32.gmra.mrb[0].mxu0 %v758
        %v873 = vpop.f32.mrb[0].mxu0
        %v874 = vadd.f32 0.0, %v873
        %v875 = vpop.f32.mrb[0].mxu0
        %876 = vmatprep.mubr.f32.mxu0 0.0
        %877 = vmatmul.mubr.f32.gmra.mrb[0].mxu0 %v761
        %v878 = vpop.f32.mrb[0].mxu0
        %v879 = vadd.f32 0.0, %v878
        %v880 = vpop.f32.mrb[0].mxu0
        %881 = vmatprep.mubr.f32.mxu0 0.0
        %882 = vmatmul.mubr.f32.gmra.mrb[0].mxu0 %v764
        %v883 = vpop.f32.mrb[0].mxu0
        %v884 = vadd.f32 0.0, %v883
        %v885 = vpop.f32.mrb[0].mxu0
        %886 = vmatprep.mubr.f32.mxu0 0.0
        %887 = vmatmul.mubr.f32.gmra.mrb[0].mxu0 %v767
        %v888 = vpop.f32.mrb[0].mxu0
        %v889 = vadd.f32 0.0, %v888
        %v890 = vpop.f32.mrb[0].mxu0
        %891 = vmatprep.mubr.f32.mxu0 0.0
        %892 = vmatmul.mubr.f32.gmra.mrb[0].mxu0 %v770
        %v893 = vpop.f32.mrb[0].mxu0
        %v894 = vadd.f32 0.0, %v893
        %v895 = vpop.f32.mrb[0].mxu0
        %896 = vmatprep.mubr.f32.mxu0 0.0
        %897 = vmatmul.mubr.f32.gmra.mrb[0].mxu0 %v773
        %v898 = vpop.f32.mrb[0].mxu0
        %v899 = vadd.f32 0.0, %v898
        %v900 = vpop.f32.mrb[0].mxu0
        %901 = vmatprep.mubr.f32.mxu0 0.0
        %902 = vmatmul.mubr.f32.gmra.mrb[0].mxu0 %v776
        %v903 = vpop.f32.mrb[0].mxu0
        %v904 = vadd.f32 0.0, %v903
        %v905 = vpop.f32.mrb[0].mxu0
        %906 = vmatprep.mubr.f32.mxu0 0.0
        %907 = vmatmul.mubr.f32.gmra.mrb[0].mxu0 %v779
        %v908 = vpop.f32.mrb[0].mxu0
        %v909 = vadd.f32 0.0, %v908
        %v910 = vpop.f32.mrb[0].mxu0
        %911 = vmatprep.mubr.f32.mxu0 0.0
        %912 = vmatmul.mubr.f32.gmra.mrb[0].mxu0 %v782
        %v913 = vpop.f32.mrb[0].mxu0
        %v914 = vadd.f32 0.0, %v913
        %v915 = vpop.f32.mrb[0].mxu0
        %916 = vmatprep.mubr.f32.mxu0 0.0
        %917 = vmatmul.mubr.f32.gmra.mrb[0].mxu0 %v785
        %v918 = vpop.f32.mrb[0].mxu0
        %v919 = vadd.f32 0.0, %v918
        %v920 = vpop.f32.mrb[0].mxu0
        %921 = vmatprep.mubr.f32.mxu0 0.0
        %922 = vmatmul.mubr.f32.gmra.mrb[0].mxu0 %v788
        %v923 = vpop.f32.mrb[0].mxu0
        %v924 = vadd.f32 0.0, %v923
        %v925 = vpop.f32.mrb[0].mxu0
        %926 = vmatprep.mubr.f32.mxu0 0.0
        %927 = vmatmul.mubr.f32.gmra.mrb[0].mxu0 %v791
        %v928 = vpop.f32.mrb[0].mxu0
        %v929 = vadd.f32 0.0, %v928
        %v930 = vpop.f32.mrb[0].mxu0
        %931 = vmatprep.mubr.f32.mxu0 0.0
        %932 = vmatmul.mubr.f32.gmra.mrb[0].mxu0 %v794
        %v933 = vpop.f32.mrb[0].mxu0
        %v934 = vadd.f32 0.0, %v933
        %v935 = vpop.f32.mrb[0].mxu0
        %936 = vmatprep.mubr.f32.mxu0 0.0
        %937 = vmatmul.mubr.f32.gmra.mrb[0].mxu0 %v797
        %v938 = vpop.f32.mrb[0].mxu0
        %v939 = vadd.f32 0.0, %v938
        %v940 = vpop.f32.mrb[0].mxu0
        %941 = vmatprep.mubr.f32.mxu0 0.0
        %942 = vmatmul.mubr.f32.gmra.mrb[0].mxu0 %v800
        %v943 = vpop.f32.mrb[0].mxu0
        %v944 = vadd.f32 0.0, %v943
        %v945 = vpop.f32.mrb[0].mxu0
        %946 = vdwg.mxu0
        %v947 = vld [vmem:[#allocation2] sm:$0x1]
        %v948 = vmax.f32 %v869, %v889
        %v949 = vmax.f32 %v874, %v894
        %v950 = vmax.f32 %v879, %v899
        %v951 = vmax.f32 %v884, %v904
        %v952 = vmax.f32 %v948, %v909
        %v953 = vmax.f32 %v949, %v914
        %v954 = vmax.f32 %v950, %v919
        %v955 = vmax.f32 %v951, %v924
        %v956 = vmax.f32 %v952, %v929
        %v957 = vmax.f32 %v953, %v934
        %v958 = vmax.f32 %v954, %v939
        %v959 = vmax.f32 %v955, %v944
        %v960 = vmax.f32 %v956, %v957
        %v961 = vmax.f32 %v958, %v959
        %v962 = vmax.f32 %v960, %v961
        %v963 = vrot.slane %v962, 4
        %v964 = vmax.f32 %v962, %v963
        %v965 = vrot.slane %v964, 2
        %v966 = vmax.f32 %v964, %v965
        %v967 = vrot.slane %v966, 1
        %v968 = vmax.f32 %v966, %v967
        %v969 = vmax.f32 %v947, %v968
        %v970 = vsub.f32 %v947, %v969
        %v971 = vmul.f32 %v970, 1.442695
        %v972 = vpow.pop %v971
        %v974 = vlaneseq
        %v975 = vshrl.u32 %v974, 7
        %v976 = vsub.s32 0, %v975
        %v977 = vrot.slane %v969, %v976
        %v979 = vsub.f32 %v869, %v977
        %v980 = vsub.f32 %v874, %v977
        %v981 = vsub.f32 %v879, %v977
        %v982 = vsub.f32 %v884, %v977
        %v983 = vsub.f32 %v889, %v977
        %v984 = vsub.f32 %v894, %v977
        %v985 = vsub.f32 %v899, %v977
        %v986 = vsub.f32 %v904, %v977
        %v987 = vsub.f32 %v909, %v977
        %v988 = vsub.f32 %v914, %v977
        %v989 = vsub.f32 %v919, %v977
        %v990 = vsub.f32 %v924, %v977
        %v991 = vsub.f32 %v929, %v977
        %v992 = vsub.f32 %v934, %v977
        %v993 = vsub.f32 %v939, %v977
        %v994 = vsub.f32 %v944, %v977
        %v995 = vmul.f32 %v979, 1.442695
        %v996 = vpow.pop %v995
        %v997 = vmul.f32 %v980, 1.442695
        %v998 = vpow.pop %v997
        %v999 = vmul.f32 %v981, 1.442695
        %v1000 = vpow.pop %v999
        %v1001 = vmul.f32 %v982, 1.442695
        %v1002 = vpow.pop %v1001
        %v1003 = vmul.f32 %v983, 1.442695
        %v1004 = vpow.pop %v1003
        %v1005 = vmul.f32 %v984, 1.442695
        %v1006 = vpow.pop %v1005
        %v1007 = vmul.f32 %v985, 1.442695
        %v1008 = vpow.pop %v1007
        %v1009 = vmul.f32 %v986, 1.442695
        %v1010 = vpow.pop %v1009
        %v1011 = vmul.f32 %v987, 1.442695
        %v1012 = vpow.pop %v1011
        %v1013 = vmul.f32 %v988, 1.442695
        %v1014 = vpow.pop %v1013
        %v1015 = vmul.f32 %v989, 1.442695
        %v1016 = vpow.pop %v1015
        %v1017 = vmul.f32 %v990, 1.442695
        %v1018 = vpow.pop %v1017
        %v1019 = vmul.f32 %v991, 1.442695
        %v1020 = vpow.pop %v1019
        %v1021 = vmul.f32 %v992, 1.442695
        %v1022 = vpow.pop %v1021
        %v1023 = vmul.f32 %v993, 1.442695
        %v1024 = vpow.pop %v1023
        %v1025 = vmul.f32 %v994, 1.442695
        %v1026 = vpow.pop %v1025
        %v1027 = vld [vmem:[#allocation3] sm:$0x1]
        %v1028 = vmul.f32 %v972, %v1027
        %v1029 = vadd.f32 %v996, %v998
        %v1030 = vadd.f32 %v1029, %v1000
        %v1031 = vadd.f32 %v1030, %v1002
        %v1032 = vadd.f32 %v1031, %v1004
        %v1033 = vadd.f32 %v1032, %v1006
        %v1034 = vadd.f32 %v1033, %v1008
        %v1035 = vadd.f32 %v1034, %v1010
        %v1036 = vadd.f32 %v1035, %v1012
        %v1037 = vadd.f32 %v1036, %v1014
        %v1038 = vadd.f32 %v1037, %v1016
        %v1039 = vadd.f32 %v1038, %v1018
        %v1040 = vadd.f32 %v1039, %v1020
        %v1041 = vadd.f32 %v1040, %v1022
        %v1042 = vadd.f32 %v1041, %v1024
        %v1043 = vadd.f32 %v1042, %v1026
        %v1044 = vrot.slane %v1043, 4
        %v1045 = vadd.f32 %v1043, %v1044
        %v1046 = vrot.slane %v1045, 2
        %v1047 = vadd.f32 %v1045, %v1046
        %v1048 = vrot.slane %v1047, 1
        %v1049 = vadd.f32 %v1047, %v1048
        %v1050 = vadd.f32 %v1028, %v1049
        %1051 = vst [vmem:[#allocation3] sm:$0x1] %v1050
        %v1052 = vld [vmem:[#allocation4] sm:$0xff]
        %v1053 = vld [vmem:[#allocation4 + $0x8] sm:$0xff]
        %v1055 = vlaneseq
        %v1056 = vshrl.u32 %v1055, 7
        %v1057 = vsub.s32 0, %v1056
        %v1058 = vrot.slane %v972, %v1057
        %v1060 = vmul.f32 %v1058, %v1052
        %v1061 = vmul.f32 %v1058, %v1053
        %1062 = vmatprep.subr.mxu0 0.0
        %1063 = vmatpush1.msra.mxu0 %v996
        %1064 = vmatprep.subr.mxu0 0.0
        %1065 = vmatpush1.msra.mxu0 %v998
        %1066 = vmatprep.subr.mxu0 0.0
        %1067 = vmatpush1.msra.mxu0 %v1000
        %1068 = vmatprep.subr.mxu0 0.0
        %1069 = vmatpush1.msra.mxu0 %v1002
        %1070 = vmatprep.subr.mxu0 0.0
        %1071 = vmatpush1.msra.mxu0 %v1004
        %1072 = vmatprep.subr.mxu0 0.0
        %1073 = vmatpush1.msra.mxu0 %v1006
        %1074 = vmatprep.subr.mxu0 0.0
        %1075 = vmatpush1.msra.mxu0 %v1008
        %1076 = vmatprep.subr.mxu0 0.0
        %1077 = vmatpush1.msra.mxu0 %v1010
        %1078 = vmatprep.subr.mxu0 0.0
        %1079 = vmatpush1.msra.mxu0 %v1012
        %1080 = vmatprep.subr.mxu0 0.0
        %1081 = vmatpush1.msra.mxu0 %v1014
        %1082 = vmatprep.subr.mxu0 0.0
        %1083 = vmatpush1.msra.mxu0 %v1016
        %1084 = vmatprep.subr.mxu0 0.0
        %1085 = vmatpush1.msra.mxu0 %v1018
        %1086 = vmatprep.subr.mxu0 0.0
        %1087 = vmatpush1.msra.mxu0 %v1020
        %1088 = vmatprep.subr.mxu0 0.0
        %1089 = vmatpush1.msra.mxu0 %v1022
        %1090 = vmatprep.subr.mxu0 0.0
        %1091 = vmatpush1.msra.mxu0 %v1024
        %1092 = vmatprep.subr.mxu0 0.0
        %1093 = vmatpush1.msra.mxu0 %v1026
        %1094 = vmatprep.subr.mxu0 0.0
        %1095 = vmatpush1.msra.mxu0 0.0
        %1096 = vmatprep.subr.mxu0 0.0
        %1097 = vmatpush1.msra.mxu0 0.0
        %1098 = vmatprep.subr.mxu0 0.0
        %1099 = vmatpush1.msra.mxu0 0.0
        %1100 = vmatprep.subr.mxu0 0.0
        %1101 = vmatpush1.msra.mxu0 0.0
        %1102 = vmatprep.subr.mxu0 0.0
        %1103 = vmatpush1.msra.mxu0 0.0
        %1104 = vmatprep.subr.mxu0 0.0
        %1105 = vmatpush1.msra.mxu0 0.0
        %1106 = vmatprep.subr.mxu0 0.0
        %1107 = vmatpush1.msra.mxu0 0.0
        %1108 = vmatprep.subr.mxu0 0.0
        %1109 = vmatpush1.msra.mxu0 0.0
        %1110 = vmatprep.subr.mxu0 0.0
        %1111 = vmatpush1.msra.mxu0 0.0
        %1112 = vmatprep.subr.mxu0 0.0
        %1113 = vmatpush1.msra.mxu0 0.0
        %1114 = vmatprep.subr.mxu0 0.0
        %1115 = vmatpush1.msra.mxu0 0.0
        %1116 = vmatprep.subr.mxu0 0.0
        %1117 = vmatpush1.msra.mxu0 0.0
        %1118 = vmatprep.subr.mxu0 0.0
        %1119 = vmatpush1.msra.mxu0 0.0
        %1120 = vmatprep.subr.mxu0 0.0
        %1121 = vmatpush1.msra.mxu0 0.0
        %1122 = vmatprep.subr.mxu0 0.0
        %1123 = vmatpush1.msra.mxu0 0.0
        %1124 = vmatprep.subr.mxu0 0.0
        %1125 = vmatpush1.msra.mxu0 0.0
        %1126 = vmatprep.mubr.f32.mxu0 0.0
        %1127 = vmatmul.mubr.f32.gmra.mrb[0].mxu0 %v718
        %v1128 = vpop.f32.mrb[0].mxu0
        %v1129 = vadd.f32 0.0, %v1128
        %v1130 = vpop.f32.mrb[0].mxu0
        %1131 = vmatprep.mubr.f32.mxu0 0.0
        %1132 = vmatmul.mubr.f32.gmra.mrb[0].mxu0 %v719
        %v1133 = vpop.f32.mrb[0].mxu0
        %v1134 = vadd.f32 0.0, %v1133
        %v1135 = vpop.f32.mrb[0].mxu0
        %1136 = vdwg.mxu0
        %v1137 = vadd.f32 %v1060, %v1129
        %v1138 = vadd.f32 %v1061, %v1134
        %1139 = vst [vmem:[#allocation4] sm:$0xff] %v1137
        %1140 = vst [vmem:[#allocation4 + $0x8] sm:$0xff] %v1138
        %1141 = vst [vmem:[#allocation2] sm:$0x1] %v969
        %p1142 = scmp.eq.s32.totalorder %s37, 1
        // Predicated region
        $region73: #{tpu_custom_call.1} parent=55 // pred_check
          %p1143 = pneg %p1142
        $region74: #{tpu_custom_call.1} parent=55 // pred_check_branch
          %1145 = sbr.rel (%p1143) target = $region76
        $region75: #{tpu_custom_call.1} parent=55 // pred_region
          %v1146 = vld [vmem:[#allocation3] sm:$0x1]
          %v1147 = vrcp.pop %v1146
          %s1148 = sld [smem:[#allocation8]]
          %v1149 = vld [vmem:[#allocation4] sm:$0xff]
          %v1150 = vld [vmem:[#allocation4 + $0x8] sm:$0xff]
          %v1152 = vlaneseq
          %v1153 = vshrl.u32 %v1152, 7
          %v1154 = vsub.s32 0, %v1153
          %v1155 = vrot.slane %v1147, %v1154
          %v1157 = vmul.f32 %v1149, %v1155
          %v1158 = vmul.f32 %v1150, %v1155
          %v1159 = vstv %s1148
          %v1160 = vmul.f32 %v1159, %v1157
          %v1161 = vmul.f32 %v1159, %v1158
          %v1162 = vld [vmem:[%s376] sm:$0xff]
          %v1163 = vld [vmem:[%s376 + $0x8] sm:$0xff]
          %v1164 = vadd.f32 %v1160, %v1162
          %v1165 = vadd.f32 %v1161, %v1163
          %1166 = vst [vmem:[%s424] sm:$0xff] %v1164
          %1167 = vst [vmem:[%s424 + $0x8] sm:$0xff] %v1165
        $region76: #{tpu_custom_call.1} parent=55 // pred_fallthru
          _
        %s1168 = sand.u32 %s266, 1
        %s1169 = scalar_lea.sflag [#allocation11], %s1168
        %s1170 = sand.u32 %s266, 1
        %s1171 = smul.addr %s1170, 16
        %s1172 = scalar_lea.vmem [#allocation14], %s1171
        // Predicated region
        $region77: #{tpu_custom_call.1} parent=55 // pred_check
          %p1173 = pneg %p276
        $region78: #{tpu_custom_call.1} parent=55 // pred_check_branch
          %1175 = sbr.rel (%p1173) target = $region80
        $region79: #{tpu_custom_call.1} parent=55 // pred_region
          %s1177 = ssub.s32 256, 256
          %1178 = vsyncadd %s1169, %s1177
          %s1179 = smul.addr %s35, 4
          %s1180 = sadd.s32 %s36, %s1179
          %s1181 = smul.addr %s1180, 128
          %s1182 = scalar_lea.hbm %s9, %s1181
          %s1183 = sshll.u32 %s1172, 4
          %s1184 = int_to_ptr.vmem [resolvable:$true] %s1183
          %1189 = dma.vmem_to_hbm [thread:$0]  %s1184, 256, %s1182, %s1169, 128, 256, 8
        $region80: #{tpu_custom_call.1} parent=55 // pred_fallthru
          _
      $region56: #{tpu_custom_call.1} parent=5 // pred_fallthru
        _
      %p1190 = scmp.le.s32.totalorder 2, %s25
      // Predicated region
      $region81: #{tpu_custom_call.1} parent=5 // pred_check
        %p1191 = pneg %p1190
      $region82: #{tpu_custom_call.1} parent=5 // pred_check_branch
        %1193 = sbr.rel (%p1191) target = $region84
      $region83: #{tpu_custom_call.1} parent=5 // pred_region
        %s1194 = ssub.s32 %s25, 2
        // Predicated region
        $region85: #{tpu_custom_call.1} parent=83 // pred_check
          %p1195 = pneg %p282
        $region86: #{tpu_custom_call.1} parent=83 // pred_check_branch
          %1197 = sbr.rel (%p1195) target = $region88
        $region87: #{tpu_custom_call.1} parent=83 // pred_region
          %s1198 = sand.u32 %s267, 1
          %s1199 = scalar_lea.sflag [#allocation11], %s1198
          %s1200 = sand.u32 %s267, 1
          %s1201 = smul.addr %s1200, 16
          %s1202 = scalar_lea.vmem [#allocation14], %s1201
          %1203 = dma.done %s1199, 256
        $region88: #{tpu_custom_call.1} parent=83 // pred_fallthru
          _
      $region84: #{tpu_custom_call.1} parent=5 // pred_fallthru
        _
    $region6: #{tpu_custom_call.1} parent=1 // loop_footer
      %s29 = sadd.s32 1, %s25
    $region7: #{tpu_custom_call.1} parent=1 // loop_footer_branch
      %24 = sbr.rel target = $region3
    $region8: #{tpu_custom_call.1} parent=1 // loop_exit
      _
    %1204 = vsyncpa [#allocation10], 1
    %s1205 = scalar_lea.sflag [#allocation10], 1
    %1206 = vsyncpa %s1205, 1
    %1207 = vsyncpa [#allocation13], 1
    %s1208 = scalar_lea.sflag [#allocation13], 1
    %1209 = vsyncpa %s1208, 1
    %1210 = vsyncpa [#allocation11], 1
    %s1211 = scalar_lea.sflag [#allocation11], 1
    %1212 = vsyncpa %s1211, 1

</llo_original>
